<compile_context>
chip_gen: v5e
topology: v5e:2x2
jax: 0.10.0
libtpu: 0.0.40
codegen_flags: <defaults>
</compile_context>

<pallas_src>
import functools
import math

import jax
import jax.numpy as jnp
import numpy as np
from jax import lax
from jax.experimental import pallas as pl
from jax.experimental.pallas import tpu as pltpu

# ---- model config (small, consistent with the module: nn.GroupNorm(32, C) needs C % 32 == 0) ----
BATCH = 2
CHANNELS = 64
NUM_GROUPS = 32
HEIGHT = 8
WIDTH = 8
EPS = 1e-5             # torch GroupNorm default eps


def vae_attention_kernel(x_ref, gmat_ref, gamma_ref, beta_ref,
                         wq_ref, bq_ref, wk_ref, bk_ref, wv_ref, bv_ref,
                         wo_ref, bo_ref, o_ref, *, num_groups, eps):
    """Whole batch in one invocation.

    x_ref:     (N, C, HW)  channel-major input (free reshape of NCHW); also the residual
    gmat_ref:  (C, C)      block-diagonal group-membership constant (1 if same group)
    gamma/beta (1, C)      GroupNorm affine params
    wq/wk/wv:  (C, C)      per-projection weights, already transposed (x @ w layout)
    bq/bk/bv:  (1, C)
    wo_ref:    (C, C)      out_proj weight, transposed
    bo_ref:    (1, C)
    o_ref:     (N, C, HW)
    """
    n_img, C, HW = x_ref.shape
    cg = C // num_groups

    # ---- channel-major -> token-major (in-kernel XLU transposes) -----------------------
    xs_chw = [x_ref[i].astype(jnp.float32) for i in range(n_img)]      # each (C, HW), residuals
    x2d = jnp.concatenate([xc.T for xc in xs_chw], axis=0)             # (N*HW, C) stacked tokens
    x3 = x2d.reshape(n_img, HW, C)                                     # (N, HW, C)

    # ---- GroupNorm ----------------------------------------------------------------------
    s1 = jnp.sum(x3, axis=1)                                           # (N, C)
    s2 = jnp.sum(x3 * x3, axis=1)                                      # (N, C)
    # Per-channel "sum over my group" in ONE hop via the block-diagonal constant
    # (two independent small matmuls; no in-kernel iota/one-hot/transpose).
    gmat = gmat_ref[...]
    gs1 = jnp.dot(s1, gmat, preferred_element_type=jnp.float32)        # (N, C)
    gs2 = jnp.dot(s2, gmat, preferred_element_type=jnp.float32)        # (N, C)

    inv_cnt = jnp.float32(1.0 / (HW * cg))
    mean_c = gs1 * inv_cnt
    # One-pass variance (E[x^2] - E[x]^2): fine at test tolerance; switch to the two-pass
    # form if production inputs carry large per-group means.
    var_c = gs2 * inv_cnt - mean_c * mean_c
    inv_c = lax.rsqrt(var_c + eps)

    gamma = gamma_ref[...].astype(jnp.float32)                         # (1, C)
    beta = beta_ref[...].astype(jnp.float32)                           # (1, C)
    scale_c = inv_c * gamma                                            # (N, C)
    shift_c = beta - mean_c * scale_c                                  # (N, C)
    xn2 = (x3 * scale_c[:, None, :] + shift_c[:, None, :]).reshape(n_img * HW, C)

    # ---- QKV projections on the stacked (N*HW, C) matrix (M = 128) ----------------------
    q = jnp.dot(xn2, wq_ref[...], preferred_element_type=jnp.float32) + bq_ref[...].astype(jnp.float32)
    k = jnp.dot(xn2, wk_ref[...], preferred_element_type=jnp.float32) + bk_ref[...].astype(jnp.float32)
    v = jnp.dot(xn2, wv_ref[...], preferred_element_type=jnp.float32) + bv_ref[...].astype(jnp.float32)
    q3 = q.reshape(n_img, HW, C)
    k3 = k.reshape(n_img, HW, C)
    v3 = v.reshape(n_img, HW, C)

    # ---- single-head self-attention (batched over images) -------------------------------
    scale = jnp.float32(1.0 / math.sqrt(C))                            # d_head == C (1 head)
    scores = jnp.einsum('nqc,nkc->nqk', q3, k3,
                        preferred_element_type=jnp.float32) * scale    # (N, HW, HW)
    m = jnp.max(scores, axis=-1, keepdims=True)
    p = jnp.exp(scores - m)
    attn = p * pl.reciprocal(jnp.sum(p, axis=-1, keepdims=True), approx=True)
    ctx = jnp.einsum('nqk,nkc->nqc', attn, v3,
                     preferred_element_type=jnp.float32)               # (N, HW, C)

    # ---- output projection (stacked again) -----------------------------------------------
    out = jnp.dot(ctx.reshape(n_img * HW, C), wo_ref[...],
                  preferred_element_type=jnp.float32) + bo_ref[...].astype(jnp.float32)
    out3 = out.reshape(n_img, HW, C)

    # ---- back to channel-major + residual add --------------------------------------------
    for i in range(n_img):
        o_ref[i] = (out3[i].T + xs_chw[i]).astype(o_ref.dtype)


def vae_attention_block(x_nchw, gamma, beta, w_in, b_in, w_out, b_out,
                        num_groups=NUM_GROUPS, eps=EPS):
    """x_nchw: (N, C, H, W) float32. Returns (N, C, H, W)."""
    n, c, h, w = x_nchw.shape
    hw = h * w
    cg = c // num_groups
    assert cg * num_groups == c

    # Free reshape only -- no wrapper transposes (they happen inside the kernel).
    x_seq = x_nchw.reshape(n, c, hw)

    # Precomputed group-membership constant (host numpy; hoisted out of the kernel).
    ch = np.arange(c)
    gmat = jnp.asarray((ch[:, None] // cg == ch[None, :] // cg).astype(np.float32))   # (C, C)

    gamma2 = gamma.reshape(1, c)
    beta2 = beta.reshape(1, c)
    # Split in_proj so q/k/v come from three lane-aligned matmuls (torch Linear weight is (3C, C)).
    wq = w_in[:c].T
    wk = w_in[c:2 * c].T
    wv = w_in[2 * c:].T
    bq = b_in[:c].reshape(1, c)
    bk = b_in[c:2 * c].reshape(1, c)
    bv = b_in[2 * c:].reshape(1, c)
    wo = w_out.T
    bo = b_out.reshape(1, c)

    kernel = functools.partial(vae_attention_kernel, num_groups=num_groups, eps=eps)
    vmem = pl.BlockSpec(memory_space=pltpu.MemorySpace.VMEM)

    out_seq = pl.pallas_call(
        kernel,
        out_shape=jax.ShapeDtypeStruct((n, c, hw), x_seq.dtype),
        in_specs=[vmem] * 12,
        out_specs=vmem,
    )(x_seq, gmat, gamma2, beta2, wq, bq, wk, bk, wv, bv, wo, bo)

    # Free reshape back to NCHW.
    return out_seq.reshape(n, c, h, w)


def reference(x_nchw, gamma, beta, w_in, b_in, w_out, b_out):
    """Pure-JAX reference mirroring the torch module."""
    n, c, h, w = x_nchw.shape
    residue = x_nchw
    xg = x_nchw.reshape(n, NUM_GROUPS, c // NUM_GROUPS, h, w)
    mean = jnp.mean(xg, axis=(2, 3, 4), keepdims=True)
    var = jnp.var(xg, axis=(2, 3, 4), keepdims=True)
    xn = ((xg - mean) / jnp.sqrt(var + EPS)).reshape(n, c, h, w)
    xn = xn * gamma.reshape(1, c, 1, 1) + beta.reshape(1, c, 1, 1)
    xs = jnp.transpose(xn.reshape(n, c, h * w), (0, 2, 1))
    qkv = jnp.einsum('nsc,dc->nsd', xs, w_in) + b_in
    q, k, v = jnp.split(qkv, 3, axis=-1)
    scores = jnp.einsum('nqc,nkc->nqk', q, k) / math.sqrt(c)
    attn = jax.nn.softmax(scores, axis=-1)
    out = jnp.einsum('nqk,nkc->nqc', attn, v)
    out = jnp.einsum('nsc,dc->nsd', out, w_out) + b_out
    out = jnp.transpose(out, (0, 2, 1)).reshape(n, c, h, w)
    return out + residue


if __name__ == "__main__":
    key = jax.random.PRNGKey(0)
    kx, kg, kb, kwi, kbi, kwo, kbo = jax.random.split(key, 7)

    x = jax.random.normal(kx, (BATCH, CHANNELS, HEIGHT, WIDTH), dtype=jnp.float32)

    # Deterministic synthetic parameters (shapes follow nn.GroupNorm / nn.Linear).
    gamma = 1.0 + 0.1 * jax.random.normal(kg, (CHANNELS,), dtype=jnp.float32)
    beta = 0.1 * jax.random.normal(kb, (CHANNELS,), dtype=jnp.float32)
    w_in = 0.05 * jax.random.normal(kwi, (3 * CHANNELS, CHANNELS), dtype=jnp.float32)
    b_in = 0.05 * jax.random.normal(kbi, (3 * CHANNELS,), dtype=jnp.float32)
    w_out = 0.05 * jax.random.normal(kwo, (CHANNELS, CHANNELS), dtype=jnp.float32)
    b_out = 0.05 * jax.random.normal(kbo, (CHANNELS,), dtype=jnp.float32)

    out = vae_attention_block(x, gamma, beta, w_in, b_in, w_out, b_out)
    out = jax.block_until_ready(out)

    ref = jax.block_until_ready(reference(x, gamma, beta, w_in, b_in, w_out, b_out))
    # Tolerance 1e-3 (was 1e-4): accommodates pl.reciprocal(approx=True) in the softmax
    # denominator; everything else is exact-f32-accumulated.
    np.testing.assert_allclose(np.asarray(out), np.asarray(ref), rtol=1e-3, atol=1e-3)

    print("KERNEL_OK")
</pallas_src>

<mosaic_0001>
module attributes {stable_mosaic.version = 11 : i64} {
  func.func @vae_attention_kernel(%arg0: memref<2x64x64xf32, #tpu.memory_space<vmem>>, %arg1: memref<64x64xf32, #tpu.memory_space<vmem>>, %arg2: memref<1x64xf32, #tpu.memory_space<vmem>>, %arg3: memref<1x64xf32, #tpu.memory_space<vmem>>, %arg4: memref<64x64xf32, #tpu.memory_space<vmem>>, %arg5: memref<1x64xf32, #tpu.memory_space<vmem>>, %arg6: memref<64x64xf32, #tpu.memory_space<vmem>>, %arg7: memref<1x64xf32, #tpu.memory_space<vmem>>, %arg8: memref<64x64xf32, #tpu.memory_space<vmem>>, %arg9: memref<1x64xf32, #tpu.memory_space<vmem>>, %arg10: memref<64x64xf32, #tpu.memory_space<vmem>>, %arg11: memref<1x64xf32, #tpu.memory_space<vmem>>, %arg12: memref<2x64x64xf32, #tpu.memory_space<vmem>>) attributes {dimension_semantics = [], scalar_prefetch = 0 : i64, scratch_operands = 0 : i64, tpu.core_type = #tpu.core_type<tc>} {
    %c0 = arith.constant 0 : index
    %c0_0 = arith.constant 0 : index
    %c0_1 = arith.constant 0 : index
    %0 = vector.load %arg0[%c0, %c0_0, %c0_1] : memref<2x64x64xf32, #tpu.memory_space<vmem>>, vector<1x64x64xf32>
    %1 = vector.shape_cast %0 : vector<1x64x64xf32> to vector<64x64xf32>
    %c1 = arith.constant 1 : index
    %c0_2 = arith.constant 0 : index
    %c0_3 = arith.constant 0 : index
    %2 = vector.load %arg0[%c1, %c0_2, %c0_3] : memref<2x64x64xf32, #tpu.memory_space<vmem>>, vector<1x64x64xf32>
    %3 = vector.shape_cast %2 : vector<1x64x64xf32> to vector<64x64xf32>
    %4 = tpu.transpose %1, [1, 0] : vector<64x64xf32> -> vector<64x64xf32>
    %5 = tpu.transpose %3, [1, 0] : vector<64x64xf32> -> vector<64x64xf32>
    %6 = tpu.concatenate %4, %5 in 0 : vector<64x64xf32>, vector<64x64xf32> -> vector<128x64xf32>
    %7 = vector.shape_cast %6 : vector<128x64xf32> to vector<2x64x64xf32>
    %cst = arith.constant dense<0.000000e+00> : vector<2x64xf32>
    %8 = vector.multi_reduction <add>, %7, %cst [1] : vector<2x64x64xf32> to vector<2x64xf32>
    %9 = arith.mulf %7, %7 : vector<2x64x64xf32>
    %cst_4 = arith.constant dense<0.000000e+00> : vector<2x64xf32>
    %10 = vector.multi_reduction <add>, %9, %cst_4 [1] : vector<2x64x64xf32> to vector<2x64xf32>
    %c0_5 = arith.constant 0 : index
    %c0_6 = arith.constant 0 : index
    %11 = vector.load %arg1[%c0_5, %c0_6] : memref<64x64xf32, #tpu.memory_space<vmem>>, vector<64x64xf32>
    %cst_7 = arith.constant dense<0.000000e+00> : vector<2x64xf32>
    %12 = tpu.matmul %8, %11, %cst_7 {dimension_numbers = #tpu.dot_dimension_numbers<[1], [0], [0], [1], [0, 0, 1, 1], [], []>} : vector<2x64xf32>, vector<64x64xf32>, vector<2x64xf32> -> vector<2x64xf32>
    %cst_8 = arith.constant dense<0.000000e+00> : vector<2x64xf32>
    %13 = tpu.matmul %10, %11, %cst_8 {dimension_numbers = #tpu.dot_dimension_numbers<[1], [0], [0], [1], [0, 0, 1, 1], [], []>} : vector<2x64xf32>, vector<64x64xf32>, vector<2x64xf32> -> vector<2x64xf32>
    %cst_9 = arith.constant 7.812500e-03 : f32
    %14 = vector.broadcast %cst_9 : f32 to vector<2x64xf32>
    %15 = arith.mulf %12, %14 : vector<2x64xf32>
    %cst_10 = arith.constant 7.812500e-03 : f32
    %16 = vector.broadcast %cst_10 : f32 to vector<2x64xf32>
    %17 = arith.mulf %13, %16 : vector<2x64xf32>
    %18 = arith.mulf %15, %15 : vector<2x64xf32>
    %19 = arith.subf %17, %18 : vector<2x64xf32>
    %cst_11 = arith.constant 9.99999974E-6 : f32
    %20 = vector.broadcast %cst_11 : f32 to vector<2x64xf32>
    %21 = arith.addf %19, %20 : vector<2x64xf32>
    %22 = math.rsqrt %21 : vector<2x64xf32>
    %c0_12 = arith.constant 0 : index
    %c0_13 = arith.constant 0 : index
    %23 = vector.load %arg2[%c0_12, %c0_13] : memref<1x64xf32, #tpu.memory_space<vmem>>, vector<1x64xf32>
    %c0_14 = arith.constant 0 : index
    %c0_15 = arith.constant 0 : index
    %24 = vector.load %arg3[%c0_14, %c0_15] : memref<1x64xf32, #tpu.memory_space<vmem>>, vector<1x64xf32>
    %25 = vector.broadcast %23 : vector<1x64xf32> to vector<2x64xf32>
    %26 = arith.mulf %22, %25 : vector<2x64xf32>
    %27 = arith.mulf %15, %26 : vector<2x64xf32>
    %28 = vector.broadcast %24 : vector<1x64xf32> to vector<2x64xf32>
    %29 = arith.subf %28, %27 : vector<2x64xf32>
    %30 = vector.shape_cast %26 : vector<2x64xf32> to vector<2x1x64xf32>
    %31 = vector.broadcast %30 : vector<2x1x64xf32> to vector<2x64x64xf32>
    %32 = arith.mulf %7, %31 : vector<2x64x64xf32>
    %33 = vector.shape_cast %29 : vector<2x64xf32> to vector<2x1x64xf32>
    %34 = vector.broadcast %33 : vector<2x1x64xf32> to vector<2x64x64xf32>
    %35 = arith.addf %32, %34 : vector<2x64x64xf32>
    %36 = vector.shape_cast %35 : vector<2x64x64xf32> to vector<128x64xf32>
    %c0_16 = arith.constant 0 : index
    %c0_17 = arith.constant 0 : index
    %37 = vector.load %arg4[%c0_16, %c0_17] : memref<64x64xf32, #tpu.memory_space<vmem>>, vector<64x64xf32>
    %cst_18 = arith.constant dense<0.000000e+00> : vector<128x64xf32>
    %38 = tpu.matmul %36, %37, %cst_18 {dimension_numbers = #tpu.dot_dimension_numbers<[1], [0], [0], [1], [0, 0, 1, 1], [], []>} : vector<128x64xf32>, vector<64x64xf32>, vector<128x64xf32> -> vector<128x64xf32>
    %c0_19 = arith.constant 0 : index
    %c0_20 = arith.constant 0 : index
    %39 = vector.load %arg5[%c0_19, %c0_20] : memref<1x64xf32, #tpu.memory_space<vmem>>, vector<1x64xf32>
    %40 = vector.broadcast %39 : vector<1x64xf32> to vector<128x64xf32>
    %41 = arith.addf %38, %40 : vector<128x64xf32>
    %c0_21 = arith.constant 0 : index
    %c0_22 = arith.constant 0 : index
    %42 = vector.load %arg6[%c0_21, %c0_22] : memref<64x64xf32, #tpu.memory_space<vmem>>, vector<64x64xf32>
    %cst_23 = arith.constant dense<0.000000e+00> : vector<128x64xf32>
    %43 = tpu.matmul %36, %42, %cst_23 {dimension_numbers = #tpu.dot_dimension_numbers<[1], [0], [0], [1], [0, 0, 1, 1], [], []>} : vector<128x64xf32>, vector<64x64xf32>, vector<128x64xf32> -> vector<128x64xf32>
    %c0_24 = arith.constant 0 : index
    %c0_25 = arith.constant 0 : index
    %44 = vector.load %arg7[%c0_24, %c0_25] : memref<1x64xf32, #tpu.memory_space<vmem>>, vector<1x64xf32>
    %45 = vector.broadcast %44 : vector<1x64xf32> to vector<128x64xf32>
    %46 = arith.addf %43, %45 : vector<128x64xf32>
    %c0_26 = arith.constant 0 : index
    %c0_27 = arith.constant 0 : index
    %47 = vector.load %arg8[%c0_26, %c0_27] : memref<64x64xf32, #tpu.memory_space<vmem>>, vector<64x64xf32>
    %cst_28 = arith.constant dense<0.000000e+00> : vector<128x64xf32>
    %48 = tpu.matmul %36, %47, %cst_28 {dimension_numbers = #tpu.dot_dimension_numbers<[1], [0], [0], [1], [0, 0, 1, 1], [], []>} : vector<128x64xf32>, vector<64x64xf32>, vector<128x64xf32> -> vector<128x64xf32>
    %c0_29 = arith.constant 0 : index
    %c0_30 = arith.constant 0 : index
    %49 = vector.load %arg9[%c0_29, %c0_30] : memref<1x64xf32, #tpu.memory_space<vmem>>, vector<1x64xf32>
    %50 = vector.broadcast %49 : vector<1x64xf32> to vector<128x64xf32>
    %51 = arith.addf %48, %50 : vector<128x64xf32>
    %52 = vector.shape_cast %41 : vector<128x64xf32> to vector<2x64x64xf32>
    %53 = vector.shape_cast %46 : vector<128x64xf32> to vector<2x64x64xf32>
    %54 = vector.shape_cast %51 : vector<128x64xf32> to vector<2x64x64xf32>
    "tpu.trace_start"() <{level = 10 : i32, message = "nqc,nkc->nqk"}> : () -> ()
    %cst_31 = arith.constant dense<0.000000e+00> : vector<2x64x64xf32>
    %55 = tpu.matmul %52, %53, %cst_31 {dimension_numbers = #tpu.dot_dimension_numbers<[2], [2], [1], [1], [0, 0, 0, 1, 1, 1], [0], [0]>} : vector<2x64x64xf32>, vector<2x64x64xf32>, vector<2x64x64xf32> -> vector<2x64x64xf32>
    "tpu.trace_stop"() : () -> ()
    %cst_32 = arith.constant 1.250000e-01 : f32
    %56 = vector.broadcast %cst_32 : f32 to vector<2x64x64xf32>
    %57 = arith.mulf %55, %56 : vector<2x64x64xf32>
    %cst_33 = arith.constant dense<0xFF800000> : vector<2x64xf32>
    %58 = vector.multi_reduction <maximumf>, %57, %cst_33 [2] : vector<2x64x64xf32> to vector<2x64xf32>
    %59 = vector.shape_cast %58 : vector<2x64xf32> to vector<2x64x1xf32>
    %60 = vector.broadcast %59 : vector<2x64x1xf32> to vector<2x64x64xf32>
    %61 = arith.subf %57, %60 : vector<2x64x64xf32>
    %62 = math.exp %61 : vector<2x64x64xf32>
    %cst_34 = arith.constant dense<0.000000e+00> : vector<2x64xf32>
    %63 = vector.multi_reduction <add>, %62, %cst_34 [2] : vector<2x64x64xf32> to vector<2x64xf32>
    %64 = vector.shape_cast %63 : vector<2x64xf32> to vector<2x64x1xf32>
    %65 = tpu.reciprocal %64 {approx = true} : vector<2x64x1xf32> -> vector<2x64x1xf32>
    %66 = vector.broadcast %65 : vector<2x64x1xf32> to vector<2x64x64xf32>
    %67 = arith.mulf %62, %66 : vector<2x64x64xf32>
    "tpu.trace_start"() <{level = 10 : i32, message = "nqk,nkc->nqc"}> : () -> ()
    %cst_35 = arith.constant dense<0.000000e+00> : vector<2x64x64xf32>
    %68 = tpu.matmul %67, %54, %cst_35 {dimension_numbers = #tpu.dot_dimension_numbers<[2], [1], [1], [2], [0, 0, 0, 1, 1, 2], [0], [0]>} : vector<2x64x64xf32>, vector<2x64x64xf32>, vector<2x64x64xf32> -> vector<2x64x64xf32>
    "tpu.trace_stop"() : () -> ()
    %69 = vector.shape_cast %68 : vector<2x64x64xf32> to vector<128x64xf32>
    %c0_36 = arith.constant 0 : index
    %c0_37 = arith.constant 0 : index
    %70 = vector.load %arg10[%c0_36, %c0_37] : memref<64x64xf32, #tpu.memory_space<vmem>>, vector<64x64xf32>
    %cst_38 = arith.constant dense<0.000000e+00> : vector<128x64xf32>
    %71 = tpu.matmul %69, %70, %cst_38 {dimension_numbers = #tpu.dot_dimension_numbers<[1], [0], [0], [1], [0, 0, 1, 1], [], []>} : vector<128x64xf32>, vector<64x64xf32>, vector<128x64xf32> -> vector<128x64xf32>
    %c0_39 = arith.constant 0 : index
    %c0_40 = arith.constant 0 : index
    %72 = vector.load %arg11[%c0_39, %c0_40] : memref<1x64xf32, #tpu.memory_space<vmem>>, vector<1x64xf32>
    %73 = vector.broadcast %72 : vector<1x64xf32> to vector<128x64xf32>
    %74 = arith.addf %71, %73 : vector<128x64xf32>
    %75 = vector.shape_cast %74 : vector<128x64xf32> to vector<2x64x64xf32>
    %76 = vector.extract_strided_slice %75 {offsets = [0, 0, 0], sizes = [1, 64, 64], strides = [1, 1, 1]} : vector<2x64x64xf32> to vector<1x64x64xf32>
    %77 = vector.shape_cast %76 : vector<1x64x64xf32> to vector<64x64xf32>
    %78 = tpu.transpose %77, [1, 0] : vector<64x64xf32> -> vector<64x64xf32>
    %79 = arith.addf %78, %1 : vector<64x64xf32>
    %c0_41 = arith.constant 0 : index
    %c0_42 = arith.constant 0 : index
    %c0_43 = arith.constant 0 : index
    %80 = vector.load %arg12[%c0_41, %c0_42, %c0_43] : memref<2x64x64xf32, #tpu.memory_space<vmem>>, vector<1x64x64xf32>
    %81 = vector.shape_cast %80 : vector<1x64x64xf32> to vector<64x64xf32>
    %82 = vector.shape_cast %79 : vector<64x64xf32> to vector<1x64x64xf32>
    tpu.vector_store %arg12[%c0_41, %c0_42, %c0_43], %82 {strides = array<i32>} : memref<2x64x64xf32, #tpu.memory_space<vmem>>, vector<1x64x64xf32>,
    %83 = vector.extract_strided_slice %75 {offsets = [1, 0, 0], sizes = [1, 64, 64], strides = [1, 1, 1]} : vector<2x64x64xf32> to vector<1x64x64xf32>
    %84 = vector.shape_cast %83 : vector<1x64x64xf32> to vector<64x64xf32>
    %85 = tpu.transpose %84, [1, 0] : vector<64x64xf32> -> vector<64x64xf32>
    %86 = arith.addf %85, %3 : vector<64x64xf32>
    %c1_44 = arith.constant 1 : index
    %c0_45 = arith.constant 0 : index
    %c0_46 = arith.constant 0 : index
    %87 = vector.load %arg12[%c1_44, %c0_45, %c0_46] : memref<2x64x64xf32, #tpu.memory_space<vmem>>, vector<1x64x64xf32>
    %88 = vector.shape_cast %87 : vector<1x64x64xf32> to vector<64x64xf32>
    %89 = vector.shape_cast %86 : vector<64x64xf32> to vector<1x64x64xf32>
    tpu.vector_store %arg12[%c1_44, %c0_45, %c0_46], %89 {strides = array<i32>} : memref<2x64x64xf32, #tpu.memory_space<vmem>>, vector<1x64x64xf32>,
    return
  }
}

</mosaic_0001>

<llo_original>
// kernel: tpu_custom_call.1
$region0: #{tpu_custom_call.1}
  #allocation0 [shape = 'u32[]', space=smem, size = 0x4, offset = 0x4, fixed_abs, tag = 'smem constant byte address 0x4 - core index']
  #allocation1 [shape = 'u32[72,128]{1,0:T(1,128)}', space=vmem, size = 0x9000, scoped, tag = 'internal scratch']
  %s0 = inlined_call_operand.hbm [shape: f32[2,64,64], index: 0, kind: input, shape index: {}]
  %s1 = inlined_call_operand.hbm [shape: f32[64,64], index: 1, kind: input, shape index: {}]
  %s2 = inlined_call_operand.vmem [shape: f32[1,64], index: 2, kind: input, shape index: {}]
  %s3 = inlined_call_operand.vmem [shape: f32[1,64], index: 3, kind: input, shape index: {}]
  %s4 = inlined_call_operand.hbm [shape: f32[64,64], index: 4, kind: input, shape index: {}]
  %s5 = inlined_call_operand.vmem [shape: f32[1,64], index: 5, kind: input, shape index: {}]
  %s6 = inlined_call_operand.hbm [shape: f32[64,64], index: 6, kind: input, shape index: {}]
  %s7 = inlined_call_operand.vmem [shape: f32[1,64], index: 7, kind: input, shape index: {}]
  %s8 = inlined_call_operand.hbm [shape: f32[64,64], index: 8, kind: input, shape index: {}]
  %s9 = inlined_call_operand.vmem [shape: f32[1,64], index: 9, kind: input, shape index: {}]
  %s10 = inlined_call_operand.hbm [shape: f32[64,64], index: 10, kind: input, shape index: {}]
  %s11 = inlined_call_operand.vmem [shape: f32[1,64], index: 11, kind: input, shape index: {}]
  %s12 = inlined_call_operand.hbm [shape: f32[2,64,64], index: 12, kind: output, shape index: {}]
  %s13 = sld [smem:[#allocation0]]
  $region82: #{tpu_custom_call.1} parent=0
    _
  %s15 = ssub.s32 1, %s13
  %s16 = scalar_select 0, %s15, %s13
  $region1: #{tpu_custom_call.1} parent=0
    #allocation2 [shape = 'u8[65536]{0}', space=vmem, size = 0x10000, scoped, tag = 'input window, operand 0, single buffered']
    #allocation3 [shape = 's32[1]{0}', space=sflag, size = 0x4, scoped, tag = 'scoped memory for tpu_custom_call.1']
    #allocation4 [shape = 's32[1]{0}', space=sflag, size = 0x4, scoped, tag = 'scoped memory for tpu_custom_call.1']
    #allocation5 [shape = 'u8[32768]{0}', space=vmem, size = 0x8000, scoped, tag = 'input window, operand 1, single buffered']
    #allocation6 [shape = 's32[1]{0}', space=sflag, size = 0x4, scoped, tag = 'scoped memory for tpu_custom_call.1']
    #allocation7 [shape = 'u8[32768]{0}', space=vmem, size = 0x8000, scoped, tag = 'input window, operand 4, single buffered']
    #allocation8 [shape = 'u8[32768]{0}', space=vmem, size = 0x8000, scoped, tag = 'input window, operand 6, single buffered']
    #allocation9 [shape = 's32[1]{0}', space=sflag, size = 0x4, scoped, tag = 'scoped memory for tpu_custom_call.1']
    #allocation10 [shape = 'u8[32768]{0}', space=vmem, size = 0x8000, scoped, tag = 'input window, operand 8, single buffered']
    #allocation11 [shape = 'u8[32768]{0}', space=vmem, size = 0x8000, scoped, tag = 'input window, operand 10, single buffered']
    #allocation12 [shape = 's32[1]{0}', space=sflag, size = 0x4, scoped, tag = 'scoped memory for tpu_custom_call.1']
    #allocation13 [shape = 'u8[65536]{0}', space=vmem, size = 0x10000, scoped, tag = 'output window, operand 0, single buffered']
    %17 = vsyncpa [#allocation3], 0
    %18 = vsyncpa [#allocation6], 0
    %19 = vsyncpa [#allocation9], 0
    %20 = vsyncpa [#allocation12], 0
    %21 = vsyncpa [#allocation4], 0
    // Predicated region
    $region2: #{tpu_custom_call.1} parent=1 // pred_check
      _
    $region3: #{tpu_custom_call.1} parent=1 // pred_check_branch
      %23 = sbr.rel (0) target = $region5
    $region4: #{tpu_custom_call.1} parent=1 // pred_region
      %25 = vsyncadd [#allocation3], 0
      %s26 = sshll.u32 %s0, 4
      %s27 = int_to_ptr.hbm [resolvable:$true] %s26
      %s28 = sshll.u32 [#allocation2], 4
      %s29 = int_to_ptr.vmem [resolvable:$true] %s28
      %34 = dma.hbm_to_vmem [thread:$0]  %s27, 2048, %s29, [#allocation3], 128, 128, 8
    $region5: #{tpu_custom_call.1} parent=1 // pred_fallthru
      _
    // Predicated region
    $region6: #{tpu_custom_call.1} parent=1 // pred_check
      _
    $region7: #{tpu_custom_call.1} parent=1 // pred_check_branch
      %36 = sbr.rel (0) target = $region9
    $region8: #{tpu_custom_call.1} parent=1 // pred_region
      %38 = vsyncadd [#allocation6], 0
      %s39 = sshll.u32 %s1, 4
      %s40 = int_to_ptr.hbm [resolvable:$true] %s39
      %s41 = sshll.u32 [#allocation5], 4
      %s42 = int_to_ptr.vmem [resolvable:$true] %s41
      %47 = dma.hbm_to_vmem [thread:$0]  %s40, 1024, %s42, [#allocation6], 128, 128, 8
    $region9: #{tpu_custom_call.1} parent=1 // pred_fallthru
      _
    // Predicated region
    $region10: #{tpu_custom_call.1} parent=1 // pred_check
      _
    $region11: #{tpu_custom_call.1} parent=1 // pred_check_branch
      %49 = sbr.rel (0) target = $region13
    $region12: #{tpu_custom_call.1} parent=1 // pred_region
      _
    $region13: #{tpu_custom_call.1} parent=1 // pred_fallthru
      _
    // Predicated region
    $region14: #{tpu_custom_call.1} parent=1 // pred_check
      _
    $region15: #{tpu_custom_call.1} parent=1 // pred_check_branch
      %51 = sbr.rel (0) target = $region17
    $region16: #{tpu_custom_call.1} parent=1 // pred_region
      _
    $region17: #{tpu_custom_call.1} parent=1 // pred_fallthru
      _
    // Predicated region
    $region18: #{tpu_custom_call.1} parent=1 // pred_check
      _
    $region19: #{tpu_custom_call.1} parent=1 // pred_check_branch
      %53 = sbr.rel (0) target = $region21
    $region20: #{tpu_custom_call.1} parent=1 // pred_region
      %55 = vsyncadd [#allocation6], 0
      %s56 = sshll.u32 %s4, 4
      %s57 = int_to_ptr.hbm [resolvable:$true] %s56
      %s58 = sshll.u32 [#allocation7], 4
      %s59 = int_to_ptr.vmem [resolvable:$true] %s58
      %64 = dma.hbm_to_vmem [thread:$0]  %s57, 1024, %s59, [#allocation6], 128, 128, 8
    $region21: #{tpu_custom_call.1} parent=1 // pred_fallthru
      _
    // Predicated region
    $region22: #{tpu_custom_call.1} parent=1 // pred_check
      _
    $region23: #{tpu_custom_call.1} parent=1 // pred_check_branch
      %66 = sbr.rel (0) target = $region25
    $region24: #{tpu_custom_call.1} parent=1 // pred_region
      _
    $region25: #{tpu_custom_call.1} parent=1 // pred_fallthru
      _
    // Predicated region
    $region26: #{tpu_custom_call.1} parent=1 // pred_check
      _
    $region27: #{tpu_custom_call.1} parent=1 // pred_check_branch
      %68 = sbr.rel (0) target = $region29
    $region28: #{tpu_custom_call.1} parent=1 // pred_region
      %70 = vsyncadd [#allocation9], 0
      %s71 = sshll.u32 %s6, 4
      %s72 = int_to_ptr.hbm [resolvable:$true] %s71
      %s73 = sshll.u32 [#allocation8], 4
      %s74 = int_to_ptr.vmem [resolvable:$true] %s73
      %79 = dma.hbm_to_vmem [thread:$0]  %s72, 1024, %s74, [#allocation9], 128, 128, 8
    $region29: #{tpu_custom_call.1} parent=1 // pred_fallthru
      _
    // Predicated region
    $region30: #{tpu_custom_call.1} parent=1 // pred_check
      _
    $region31: #{tpu_custom_call.1} parent=1 // pred_check_branch
      %81 = sbr.rel (0) target = $region33
    $region32: #{tpu_custom_call.1} parent=1 // pred_region
      _
    $region33: #{tpu_custom_call.1} parent=1 // pred_fallthru
      _
    // Predicated region
    $region34: #{tpu_custom_call.1} parent=1 // pred_check
      _
    $region35: #{tpu_custom_call.1} parent=1 // pred_check_branch
      %83 = sbr.rel (0) target = $region37
    $region36: #{tpu_custom_call.1} parent=1 // pred_region
      %85 = vsyncadd [#allocation9], 0
      %s86 = sshll.u32 %s8, 4
      %s87 = int_to_ptr.hbm [resolvable:$true] %s86
      %s88 = sshll.u32 [#allocation10], 4
      %s89 = int_to_ptr.vmem [resolvable:$true] %s88
      %94 = dma.hbm_to_vmem [thread:$0]  %s87, 1024, %s89, [#allocation9], 128, 128, 8
    $region37: #{tpu_custom_call.1} parent=1 // pred_fallthru
      _
    // Predicated region
    $region38: #{tpu_custom_call.1} parent=1 // pred_check
      _
    $region39: #{tpu_custom_call.1} parent=1 // pred_check_branch
      %96 = sbr.rel (0) target = $region41
    $region40: #{tpu_custom_call.1} parent=1 // pred_region
      _
    $region41: #{tpu_custom_call.1} parent=1 // pred_fallthru
      _
    // Predicated region
    $region42: #{tpu_custom_call.1} parent=1 // pred_check
      _
    $region43: #{tpu_custom_call.1} parent=1 // pred_check_branch
      %98 = sbr.rel (0) target = $region45
    $region44: #{tpu_custom_call.1} parent=1 // pred_region
      %100 = vsyncadd [#allocation12], 0
      %s101 = sshll.u32 %s10, 4
      %s102 = int_to_ptr.hbm [resolvable:$true] %s101
      %s103 = sshll.u32 [#allocation11], 4
      %s104 = int_to_ptr.vmem [resolvable:$true] %s103
      %109 = dma.hbm_to_vmem [thread:$0]  %s102, 1024, %s104, [#allocation12], 128, 128, 8
    $region45: #{tpu_custom_call.1} parent=1 // pred_fallthru
      _
    // Predicated region
    $region46: #{tpu_custom_call.1} parent=1 // pred_check
      _
    $region47: #{tpu_custom_call.1} parent=1 // pred_check_branch
      %111 = sbr.rel (0) target = $region49
    $region48: #{tpu_custom_call.1} parent=1 // pred_region
      _
    $region49: #{tpu_custom_call.1} parent=1 // pred_fallthru
      _
    // Predicated region
    $region50: #{tpu_custom_call.1} parent=1 // pred_check
      _
    $region51: #{tpu_custom_call.1} parent=1 // pred_check_branch
      %113 = sbr.rel (0) target = $region53
    $region52: #{tpu_custom_call.1} parent=1 // pred_region
      %115 = dma.done [#allocation3], 2048
    $region53: #{tpu_custom_call.1} parent=1 // pred_fallthru
      _
    // Predicated region
    $region54: #{tpu_custom_call.1} parent=1 // pred_check
      _
    $region55: #{tpu_custom_call.1} parent=1 // pred_check_branch
      %117 = sbr.rel (0) target = $region57
    $region56: #{tpu_custom_call.1} parent=1 // pred_region
      %119 = dma.done [#allocation6], 1024
    $region57: #{tpu_custom_call.1} parent=1 // pred_fallthru
      _
    // Predicated region
    $region58: #{tpu_custom_call.1} parent=1 // pred_check
      _
    $region59: #{tpu_custom_call.1} parent=1 // pred_check_branch
      %121 = sbr.rel (0) target = $region61
    $region60: #{tpu_custom_call.1} parent=1 // pred_region
      %123 = dma.done [#allocation6], 1024
    $region61: #{tpu_custom_call.1} parent=1 // pred_fallthru
      _
    // Predicated region
    $region62: #{tpu_custom_call.1} parent=1 // pred_check
      _
    $region63: #{tpu_custom_call.1} parent=1 // pred_check_branch
      %125 = sbr.rel (0) target = $region65
    $region64: #{tpu_custom_call.1} parent=1 // pred_region
      %127 = dma.done [#allocation9], 1024
    $region65: #{tpu_custom_call.1} parent=1 // pred_fallthru
      _
    // Predicated region
    $region66: #{tpu_custom_call.1} parent=1 // pred_check
      _
    $region67: #{tpu_custom_call.1} parent=1 // pred_check_branch
      %129 = sbr.rel (0) target = $region69
    $region68: #{tpu_custom_call.1} parent=1 // pred_region
      %131 = dma.done [#allocation9], 1024
    $region69: #{tpu_custom_call.1} parent=1 // pred_fallthru
      _
    // Predicated region
    $region70: #{tpu_custom_call.1} parent=1 // pred_check
      _
    $region71: #{tpu_custom_call.1} parent=1 // pred_check_branch
      %133 = sbr.rel (0) target = $region73
    $region72: #{tpu_custom_call.1} parent=1 // pred_region
      %135 = dma.done [#allocation12], 1024
    $region73: #{tpu_custom_call.1} parent=1 // pred_fallthru
      _
    %v136 = vld [vmem:[#allocation2] sm:$0xff]
    %v137 = vld [vmem:[#allocation2 + $0x8] sm:$0xff]
    %v138 = vld [vmem:[#allocation2 + $0x10] sm:$0xff]
    %v139 = vld [vmem:[#allocation2 + $0x18] sm:$0xff]
    %v140 = vld [vmem:[#allocation2 + $0x20] sm:$0xff]
    %v141 = vld [vmem:[#allocation2 + $0x28] sm:$0xff]
    %v142 = vld [vmem:[#allocation2 + $0x30] sm:$0xff]
    %v143 = vld [vmem:[#allocation2 + $0x38] sm:$0xff]
    %s144 = scalar_lea.vmem [#allocation2], 64
    %v145 = vld [vmem:[%s144] sm:$0xff]
    %v146 = vld [vmem:[%s144 + $0x8] sm:$0xff]
    %v147 = vld [vmem:[%s144 + $0x10] sm:$0xff]
    %v148 = vld [vmem:[%s144 + $0x18] sm:$0xff]
    %v149 = vld [vmem:[%s144 + $0x20] sm:$0xff]
    %v150 = vld [vmem:[%s144 + $0x28] sm:$0xff]
    %v151 = vld [vmem:[%s144 + $0x30] sm:$0xff]
    %v152 = vld [vmem:[%s144 + $0x38] sm:$0xff]
    %153 = vxpose.xlu0.b32.start [1/16] %v136, 128
    %154 = vxpose.xlu0.b32.cont [2/16] %v137, 128
    %155 = vxpose.xlu0.b32.cont [3/16] %v138, 128
    %156 = vxpose.xlu0.b32.cont [4/16] %v139, 128
    %157 = vxpose.xlu0.b32.cont [5/16] %v140, 128
    %158 = vxpose.xlu0.b32.cont [6/16] %v141, 128
    %159 = vxpose.xlu0.b32.cont [7/16] %v142, 128
    %160 = vxpose.xlu0.b32.cont [8/16] %v143, 128
    %161 = vxpose.xlu0.b32.cont [9/16] 0.0, 128
    %162 = vxpose.xlu0.b32.cont [10/16] 0.0, 128
    %163 = vxpose.xlu0.b32.cont [11/16] 0.0, 128
    %164 = vxpose.xlu0.b32.cont [12/16] 0.0, 128
    %165 = vxpose.xlu0.b32.cont [13/16] 0.0, 128
    %166 = vxpose.xlu0.b32.cont [14/16] 0.0, 128
    %167 = vxpose.xlu0.b32.cont [15/16] 0.0, 128
    %168 = vxpose.xlu0.b32.end [16/16] 0.0, 128
    %v169 = vpop.trf.xlu0
    %v170 = vpop.trf.xlu0
    %v171 = vpop.trf.xlu0
    %v172 = vpop.trf.xlu0
    %v173 = vpop.trf.xlu0
    %v174 = vpop.trf.xlu0
    %v175 = vpop.trf.xlu0
    %v176 = vpop.trf.xlu0
    %v177 = vpop.trf.xlu0
    %v178 = vpop.trf.xlu0
    %v179 = vpop.trf.xlu0
    %v180 = vpop.trf.xlu0
    %v181 = vpop.trf.xlu0
    %v182 = vpop.trf.xlu0
    %v183 = vpop.trf.xlu0
    %v184 = vpop.trf.xlu0
    %185 = vxpose.xlu0.b32.start [1/16] %v145, 128
    %186 = vxpose.xlu0.b32.cont [2/16] %v146, 128
    %187 = vxpose.xlu0.b32.cont [3/16] %v147, 128
    %188 = vxpose.xlu0.b32.cont [4/16] %v148, 128
    %189 = vxpose.xlu0.b32.cont [5/16] %v149, 128
    %190 = vxpose.xlu0.b32.cont [6/16] %v150, 128
    %191 = vxpose.xlu0.b32.cont [7/16] %v151, 128
    %192 = vxpose.xlu0.b32.cont [8/16] %v152, 128
    %193 = vxpose.xlu0.b32.cont [9/16] 0.0, 128
    %194 = vxpose.xlu0.b32.cont [10/16] 0.0, 128
    %195 = vxpose.xlu0.b32.cont [11/16] 0.0, 128
    %196 = vxpose.xlu0.b32.cont [12/16] 0.0, 128
    %197 = vxpose.xlu0.b32.cont [13/16] 0.0, 128
    %198 = vxpose.xlu0.b32.cont [14/16] 0.0, 128
    %199 = vxpose.xlu0.b32.cont [15/16] 0.0, 128
    %200 = vxpose.xlu0.b32.end [16/16] 0.0, 128
    %v201 = vpop.trf.xlu0
    %v202 = vpop.trf.xlu0
    %v203 = vpop.trf.xlu0
    %v204 = vpop.trf.xlu0
    %v205 = vpop.trf.xlu0
    %v206 = vpop.trf.xlu0
    %v207 = vpop.trf.xlu0
    %v208 = vpop.trf.xlu0
    %v209 = vpop.trf.xlu0
    %v210 = vpop.trf.xlu0
    %v211 = vpop.trf.xlu0
    %v212 = vpop.trf.xlu0
    %v213 = vpop.trf.xlu0
    %v214 = vpop.trf.xlu0
    %v215 = vpop.trf.xlu0
    %v216 = vpop.trf.xlu0
    %vm217 = vcmask 523264
    %v218 = vsel %vm217, %v169, 0.0
    %v219 = vsel %vm217, %v170, 0.0
    %v220 = vadd.f32 %v218, %v219
    %v221 = vsel %vm217, %v171, 0.0
    %v222 = vadd.f32 %v220, %v221
    %v223 = vsel %vm217, %v172, 0.0
    %v224 = vadd.f32 %v222, %v223
    %v225 = vsel %vm217, %v173, 0.0
    %v226 = vadd.f32 %v224, %v225
    %v227 = vsel %vm217, %v174, 0.0
    %v228 = vadd.f32 %v226, %v227
    %v229 = vsel %vm217, %v175, 0.0
    %v230 = vadd.f32 %v228, %v229
    %v231 = vsel %vm217, %v176, 0.0
    %v232 = vadd.f32 %v230, %v231
    %v233 = vrot.slane %v232, 4
    %v234 = vadd.f32 %v232, %v233
    %v235 = vrot.slane %v234, 2
    %v236 = vadd.f32 %v234, %v235
    %v237 = vrot.slane %v236, 1
    %v238 = vadd.f32 %v236, %v237
    %v239 = vsel %vm217, %v201, 0.0
    %v240 = vsel %vm217, %v202, 0.0
    %v241 = vadd.f32 %v239, %v240
    %v242 = vsel %vm217, %v203, 0.0
    %v243 = vadd.f32 %v241, %v242
    %v244 = vsel %vm217, %v204, 0.0
    %v245 = vadd.f32 %v243, %v244
    %v246 = vsel %vm217, %v205, 0.0
    %v247 = vadd.f32 %v245, %v246
    %v248 = vsel %vm217, %v206, 0.0
    %v249 = vadd.f32 %v247, %v248
    %v250 = vsel %vm217, %v207, 0.0
    %v251 = vadd.f32 %v249, %v250
    %v252 = vsel %vm217, %v208, 0.0
    %v253 = vadd.f32 %v251, %v252
    %v254 = vrot.slane %v253, 4
    %v255 = vadd.f32 %v253, %v254
    %v256 = vrot.slane %v255, 2
    %v257 = vadd.f32 %v255, %v256
    %v258 = vrot.slane %v257, 1
    %v259 = vadd.f32 %v257, %v258
    %v260 = vmul.f32 %v169, %v169
    %v261 = vmul.f32 %v170, %v170
    %v262 = vmul.f32 %v171, %v171
    %v263 = vmul.f32 %v172, %v172
    %v264 = vmul.f32 %v173, %v173
    %v265 = vmul.f32 %v174, %v174
    %v266 = vmul.f32 %v175, %v175
    %v267 = vmul.f32 %v176, %v176
    %v268 = vmul.f32 %v201, %v201
    %v269 = vmul.f32 %v202, %v202
    %v270 = vmul.f32 %v203, %v203
    %v271 = vmul.f32 %v204, %v204
    %v272 = vmul.f32 %v205, %v205
    %v273 = vmul.f32 %v206, %v206
    %v274 = vmul.f32 %v207, %v207
    %v275 = vmul.f32 %v208, %v208
    %v276 = vsel %vm217, %v260, 0.0
    %v277 = vsel %vm217, %v261, 0.0
    %v278 = vadd.f32 %v276, %v277
    %v279 = vsel %vm217, %v262, 0.0
    %v280 = vadd.f32 %v278, %v279
    %v281 = vsel %vm217, %v263, 0.0
    %v282 = vadd.f32 %v280, %v281
    %v283 = vsel %vm217, %v264, 0.0
    %v284 = vadd.f32 %v282, %v283
    %v285 = vsel %vm217, %v265, 0.0
    %v286 = vadd.f32 %v284, %v285
    %v287 = vsel %vm217, %v266, 0.0
    %v288 = vadd.f32 %v286, %v287
    %v289 = vsel %vm217, %v267, 0.0
    %v290 = vadd.f32 %v288, %v289
    %v291 = vrot.slane %v290, 4
    %v292 = vadd.f32 %v290, %v291
    %v293 = vrot.slane %v292, 2
    %v294 = vadd.f32 %v292, %v293
    %v295 = vrot.slane %v294, 1
    %v296 = vadd.f32 %v294, %v295
    %v297 = vsel %vm217, %v268, 0.0
    %v298 = vsel %vm217, %v269, 0.0
    %v299 = vadd.f32 %v297, %v298
    %v300 = vsel %vm217, %v270, 0.0
    %v301 = vadd.f32 %v299, %v300
    %v302 = vsel %vm217, %v271, 0.0
    %v303 = vadd.f32 %v301, %v302
    %v304 = vsel %vm217, %v272, 0.0
    %v305 = vadd.f32 %v303, %v304
    %v306 = vsel %vm217, %v273, 0.0
    %v307 = vadd.f32 %v305, %v306
    %v308 = vsel %vm217, %v274, 0.0
    %v309 = vadd.f32 %v307, %v308
    %v310 = vsel %vm217, %v275, 0.0
    %v311 = vadd.f32 %v309, %v310
    %v312 = vrot.slane %v311, 4
    %v313 = vadd.f32 %v311, %v312
    %v314 = vrot.slane %v313, 2
    %v315 = vadd.f32 %v313, %v314
    %v316 = vrot.slane %v315, 1
    %v317 = vadd.f32 %v315, %v316
    %v318 = vld [vmem:[#allocation5] sm:$0xff]
    %v319 = vld [vmem:[#allocation5 + $0x8] sm:$0xff]
    %v320 = vld [vmem:[#allocation5 + $0x10] sm:$0xff]
    %v321 = vld [vmem:[#allocation5 + $0x18] sm:$0xff]
    %v322 = vld [vmem:[#allocation5 + $0x20] sm:$0xff]
    %v323 = vld [vmem:[#allocation5 + $0x28] sm:$0xff]
    %v324 = vld [vmem:[#allocation5 + $0x30] sm:$0xff]
    %v325 = vld [vmem:[#allocation5 + $0x38] sm:$0xff]
    %vm328 = vcmask 1041409
    %v329 = vsel %vm328, %v259, %v238
    %v330 = vsel %vm217, %v329, 0
    %332 = vmatpush.msra.mxu0 0.0
    %333 = vmatpush.msra.mxu0 0.0
    %334 = vmatpush.msra.mxu0 0.0
    %335 = vmatpush.msra.mxu0 0.0
    %336 = vmatpush.msra.mxu0 0.0
    %337 = vmatpush.msra.mxu0 0.0
    %338 = vmatpush.msra.mxu0 0.0
    %339 = vmatpush.msra.mxu0 0.0
    %340 = vmatpush.msra.mxu0 %v325
    %341 = vmatpush.msra.mxu0 %v324
    %342 = vmatpush.msra.mxu0 %v323
    %343 = vmatpush.msra.mxu0 %v322
    %344 = vmatpush.msra.mxu0 %v321
    %345 = vmatpush.msra.mxu0 %v320
    %346 = vmatpush.msra.mxu0 %v319
    %347 = vmatpush.msra.mxu0 %v318
    %348 = vmatmul.f32.gmra.mxu0 %v330
    %v349 = vpop.f32.mrf.mxu0
    %v350 = vadd.f32 0.0, %v349
    %351 = vdwg.mxu0
    %v354 = vsel %vm328, %v317, %v296
    %v355 = vsel %vm217, %v354, 0
    %357 = vmatpush.msra.mxu0 0.0
    %358 = vmatpush.msra.mxu0 0.0
    %359 = vmatpush.msra.mxu0 0.0
    %360 = vmatpush.msra.mxu0 0.0
    %361 = vmatpush.msra.mxu0 0.0
    %362 = vmatpush.msra.mxu0 0.0
    %363 = vmatpush.msra.mxu0 0.0
    %364 = vmatpush.msra.mxu0 0.0
    %365 = vmatpush.msra.mxu0 %v325
    %366 = vmatpush.msra.mxu0 %v324
    %367 = vmatpush.msra.mxu0 %v323
    %368 = vmatpush.msra.mxu0 %v322
    %369 = vmatpush.msra.mxu0 %v321
    %370 = vmatpush.msra.mxu0 %v320
    %371 = vmatpush.msra.mxu0 %v319
    %372 = vmatpush.msra.mxu0 %v318
    %373 = vmatmul.f32.gmra.mxu0 %v355
    %v374 = vpop.f32.mrf.mxu0
    %v375 = vadd.f32 0.0, %v374
    %376 = vdwg.mxu0
    %v377 = vmul.f32 %v350, 0.0078125
    %v378 = vmul.f32 %v375, 0.0078125
    %v379 = vmul.f32 %v377, %v377
    %v380 = vsub.f32 %v378, %v379
    %v381 = vadd.f32 %v380, 1e-05
    %v382 = vrsqrt.pop %v381
    %v383 = vmul.f32 %v382, %v381
    %v384 = vmul.f32 %v383, %v382
    %v385 = vmul.f32 0.5, %v384
    %v386 = vsub.f32 1.5, %v385
    %v387 = vmul.f32 %v382, %v386
    %vm388 = vweird.f32 %v381
    %vm389 = vweird.f32 %v382
    %vm390 = vmor %vm388, %vm389
    %v391 = vsel %vm390, %v382, %v387
    %v392 = vld [vmem:[%s2] sm:$0x1]
    %v393 = vld [vmem:[%s3] sm:$0x1]
    %v395 = vperm.slane %v392, 0
    %v397 = vmul.f32 %v391, %v395
    %v398 = vmul.f32 %v377, %v397
    %v400 = vperm.slane %v393, 0
    %v402 = vsub.f32 %v400, %v398
    %v404 = vrot.slane %v397, 1
    %v405 = vperm.slane %v397, 0
    %v406 = vperm.slane %v404, 0
    %v409 = vmul.f32 %v169, %v405
    %v410 = vmul.f32 %v170, %v405
    %v411 = vmul.f32 %v171, %v405
    %v412 = vmul.f32 %v172, %v405
    %v413 = vmul.f32 %v173, %v405
    %v414 = vmul.f32 %v174, %v405
    %v415 = vmul.f32 %v175, %v405
    %v416 = vmul.f32 %v176, %v405
    %v417 = vmul.f32 %v201, %v406
    %v418 = vmul.f32 %v202, %v406
    %v419 = vmul.f32 %v203, %v406
    %v420 = vmul.f32 %v204, %v406
    %v421 = vmul.f32 %v205, %v406
    %v422 = vmul.f32 %v206, %v406
    %v423 = vmul.f32 %v207, %v406
    %v424 = vmul.f32 %v208, %v406
    %v426 = vrot.slane %v402, 1
    %v427 = vperm.slane %v402, 0
    %v428 = vperm.slane %v426, 0
    %v431 = vadd.f32 %v409, %v427
    %v432 = vadd.f32 %v410, %v427
    %v433 = vadd.f32 %v411, %v427
    %v434 = vadd.f32 %v412, %v427
    %v435 = vadd.f32 %v413, %v427
    %v436 = vadd.f32 %v414, %v427
    %v437 = vadd.f32 %v415, %v427
    %v438 = vadd.f32 %v416, %v427
    %v439 = vadd.f32 %v417, %v428
    %v440 = vadd.f32 %v418, %v428
    %v441 = vadd.f32 %v419, %v428
    %v442 = vadd.f32 %v420, %v428
    %v443 = vadd.f32 %v421, %v428
    %v444 = vadd.f32 %v422, %v428
    %v445 = vadd.f32 %v423, %v428
    %v446 = vadd.f32 %v424, %v428
    %v447 = vld [vmem:[#allocation7] sm:$0xff]
    %v448 = vld [vmem:[#allocation7 + $0x8] sm:$0xff]
    %v449 = vld [vmem:[#allocation7 + $0x10] sm:$0xff]
    %v450 = vld [vmem:[#allocation7 + $0x18] sm:$0xff]
    %v451 = vld [vmem:[#allocation7 + $0x20] sm:$0xff]
    %v452 = vld [vmem:[#allocation7 + $0x28] sm:$0xff]
    %v453 = vld [vmem:[#allocation7 + $0x30] sm:$0xff]
    %v454 = vld [vmem:[#allocation7 + $0x38] sm:$0xff]
    %v455 = vld [vmem:[%s5] sm:$0x1]
    %v457 = vperm.slane %v455, 0
    %v460 = vsel %vm217, %v431, 0
    %v463 = vsel %vm217, %v432, 0
    %v466 = vsel %vm217, %v433, 0
    %v469 = vsel %vm217, %v434, 0
    %v472 = vsel %vm217, %v435, 0
    %v475 = vsel %vm217, %v436, 0
    %v478 = vsel %vm217, %v437, 0
    %v481 = vsel %vm217, %v438, 0
    %v484 = vsel %vm217, %v439, 0
    %v487 = vsel %vm217, %v440, 0
    %v490 = vsel %vm217, %v441, 0
    %v493 = vsel %vm217, %v442, 0
    %v496 = vsel %vm217, %v443, 0
    %v499 = vsel %vm217, %v444, 0
    %v502 = vsel %vm217, %v445, 0
    %v505 = vsel %vm217, %v446, 0
    %507 = vmatpush.msra.mxu0 0.0
    %508 = vmatpush.msra.mxu0 0.0
    %509 = vmatpush.msra.mxu0 0.0
    %510 = vmatpush.msra.mxu0 0.0
    %511 = vmatpush.msra.mxu0 0.0
    %512 = vmatpush.msra.mxu0 0.0
    %513 = vmatpush.msra.mxu0 0.0
    %514 = vmatpush.msra.mxu0 0.0
    %515 = vmatpush.msra.mxu0 %v454
    %516 = vmatpush.msra.mxu0 %v453
    %517 = vmatpush.msra.mxu0 %v452
    %518 = vmatpush.msra.mxu0 %v451
    %519 = vmatpush.msra.mxu0 %v450
    %520 = vmatpush.msra.mxu0 %v449
    %521 = vmatpush.msra.mxu0 %v448
    %522 = vmatpush.msra.mxu0 %v447
    %523 = vmatmul.f32.gmra.mxu0 %v460
    %v524 = vpop.f32.mrf.mxu0
    %v525 = vadd.f32 %v457, %v524
    %526 = vmatmul.f32.gmra.mxu0 %v463
    %v527 = vpop.f32.mrf.mxu0
    %v528 = vadd.f32 %v457, %v527
    %529 = vmatmul.f32.gmra.mxu0 %v466
    %v530 = vpop.f32.mrf.mxu0
    %v531 = vadd.f32 %v457, %v530
    %532 = vmatmul.f32.gmra.mxu0 %v469
    %v533 = vpop.f32.mrf.mxu0
    %v534 = vadd.f32 %v457, %v533
    %535 = vmatmul.f32.gmra.mxu0 %v472
    %v536 = vpop.f32.mrf.mxu0
    %v537 = vadd.f32 %v457, %v536
    %538 = vmatmul.f32.gmra.mxu0 %v475
    %v539 = vpop.f32.mrf.mxu0
    %v540 = vadd.f32 %v457, %v539
    %541 = vmatmul.f32.gmra.mxu0 %v478
    %v542 = vpop.f32.mrf.mxu0
    %v543 = vadd.f32 %v457, %v542
    %544 = vmatmul.f32.gmra.mxu0 %v481
    %v545 = vpop.f32.mrf.mxu0
    %v546 = vadd.f32 %v457, %v545
    %547 = vmatmul.f32.gmra.mxu0 %v484
    %v548 = vpop.f32.mrf.mxu0
    %v549 = vadd.f32 %v457, %v548
    %550 = vmatmul.f32.gmra.mxu0 %v487
    %v551 = vpop.f32.mrf.mxu0
    %v552 = vadd.f32 %v457, %v551
    %553 = vmatmul.f32.gmra.mxu0 %v490
    %v554 = vpop.f32.mrf.mxu0
    %v555 = vadd.f32 %v457, %v554
    %556 = vmatmul.f32.gmra.mxu0 %v493
    %v557 = vpop.f32.mrf.mxu0
    %v558 = vadd.f32 %v457, %v557
    %559 = vmatmul.f32.gmra.mxu0 %v496
    %v560 = vpop.f32.mrf.mxu0
    %v561 = vadd.f32 %v457, %v560
    %562 = vmatmul.f32.gmra.mxu0 %v499
    %v563 = vpop.f32.mrf.mxu0
    %v564 = vadd.f32 %v457, %v563
    %565 = vmatmul.f32.gmra.mxu0 %v502
    %v566 = vpop.f32.mrf.mxu0
    %v567 = vadd.f32 %v457, %v566
    %568 = vmatmul.f32.gmra.mxu0 %v505
    %v569 = vpop.f32.mrf.mxu0
    %v570 = vadd.f32 %v457, %v569
    %571 = vdwg.mxu0
    %v572 = vld [vmem:[#allocation8] sm:$0xff]
    %v573 = vld [vmem:[#allocation8 + $0x8] sm:$0xff]
    %v574 = vld [vmem:[#allocation8 + $0x10] sm:$0xff]
    %v575 = vld [vmem:[#allocation8 + $0x18] sm:$0xff]
    %v576 = vld [vmem:[#allocation8 + $0x20] sm:$0xff]
    %v577 = vld [vmem:[#allocation8 + $0x28] sm:$0xff]
    %v578 = vld [vmem:[#allocation8 + $0x30] sm:$0xff]
    %v579 = vld [vmem:[#allocation8 + $0x38] sm:$0xff]
    %v580 = vld [vmem:[%s7] sm:$0x1]
    %v582 = vperm.slane %v580, 0
    %584 = vmatpush.msra.mxu0 0.0
    %585 = vmatpush.msra.mxu0 0.0
    %586 = vmatpush.msra.mxu0 0.0
    %587 = vmatpush.msra.mxu0 0.0
    %588 = vmatpush.msra.mxu0 0.0
    %589 = vmatpush.msra.mxu0 0.0
    %590 = vmatpush.msra.mxu0 0.0
    %591 = vmatpush.msra.mxu0 0.0
    %592 = vmatpush.msra.mxu0 %v579
    %593 = vmatpush.msra.mxu0 %v578
    %594 = vmatpush.msra.mxu0 %v577
    %595 = vmatpush.msra.mxu0 %v576
    %596 = vmatpush.msra.mxu0 %v575
    %597 = vmatpush.msra.mxu0 %v574
    %598 = vmatpush.msra.mxu0 %v573
    %599 = vmatpush.msra.mxu0 %v572
    %600 = vmatmul.f32.gmra.mxu0 %v460
    %v601 = vpop.f32.mrf.mxu0
    %v602 = vadd.f32 %v582, %v601
    %603 = vmatmul.f32.gmra.mxu0 %v463
    %v604 = vpop.f32.mrf.mxu0
    %v605 = vadd.f32 %v582, %v604
    %606 = vmatmul.f32.gmra.mxu0 %v466
    %v607 = vpop.f32.mrf.mxu0
    %v608 = vadd.f32 %v582, %v607
    %609 = vmatmul.f32.gmra.mxu0 %v469
    %v610 = vpop.f32.mrf.mxu0
    %v611 = vadd.f32 %v582, %v610
    %612 = vmatmul.f32.gmra.mxu0 %v472
    %v613 = vpop.f32.mrf.mxu0
    %v614 = vadd.f32 %v582, %v613
    %615 = vmatmul.f32.gmra.mxu0 %v475
    %v616 = vpop.f32.mrf.mxu0
    %v617 = vadd.f32 %v582, %v616
    %618 = vmatmul.f32.gmra.mxu0 %v478
    %v619 = vpop.f32.mrf.mxu0
    %v620 = vadd.f32 %v582, %v619
    %621 = vmatmul.f32.gmra.mxu0 %v481
    %v622 = vpop.f32.mrf.mxu0
    %v623 = vadd.f32 %v582, %v622
    %624 = vmatmul.f32.gmra.mxu0 %v484
    %v625 = vpop.f32.mrf.mxu0
    %v626 = vadd.f32 %v582, %v625
    %627 = vmatmul.f32.gmra.mxu0 %v487
    %v628 = vpop.f32.mrf.mxu0
    %v629 = vadd.f32 %v582, %v628
    %630 = vmatmul.f32.gmra.mxu0 %v490
    %v631 = vpop.f32.mrf.mxu0
    %v632 = vadd.f32 %v582, %v631
    %633 = vmatmul.f32.gmra.mxu0 %v493
    %v634 = vpop.f32.mrf.mxu0
    %v635 = vadd.f32 %v582, %v634
    %636 = vmatmul.f32.gmra.mxu0 %v496
    %v637 = vpop.f32.mrf.mxu0
    %v638 = vadd.f32 %v582, %v637
    %639 = vmatmul.f32.gmra.mxu0 %v499
    %v640 = vpop.f32.mrf.mxu0
    %v641 = vadd.f32 %v582, %v640
    %642 = vmatmul.f32.gmra.mxu0 %v502
    %v643 = vpop.f32.mrf.mxu0
    %v644 = vadd.f32 %v582, %v643
    %645 = vmatmul.f32.gmra.mxu0 %v505
    %v646 = vpop.f32.mrf.mxu0
    %v647 = vadd.f32 %v582, %v646
    %648 = vdwg.mxu0
    %v649 = vld [vmem:[#allocation10] sm:$0xff]
    %v650 = vld [vmem:[#allocation10 + $0x8] sm:$0xff]
    %v651 = vld [vmem:[#allocation10 + $0x10] sm:$0xff]
    %v652 = vld [vmem:[#allocation10 + $0x18] sm:$0xff]
    %v653 = vld [vmem:[#allocation10 + $0x20] sm:$0xff]
    %v654 = vld [vmem:[#allocation10 + $0x28] sm:$0xff]
    %v655 = vld [vmem:[#allocation10 + $0x30] sm:$0xff]
    %v656 = vld [vmem:[#allocation10 + $0x38] sm:$0xff]
    %v657 = vld [vmem:[%s9] sm:$0x1]
    %v659 = vperm.slane %v657, 0
    %661 = vmatpush.msra.mxu0 0.0
    %662 = vmatpush.msra.mxu0 0.0
    %663 = vmatpush.msra.mxu0 0.0
    %664 = vmatpush.msra.mxu0 0.0
    %665 = vmatpush.msra.mxu0 0.0
    %666 = vmatpush.msra.mxu0 0.0
    %667 = vmatpush.msra.mxu0 0.0
    %668 = vmatpush.msra.mxu0 0.0
    %669 = vmatpush.msra.mxu0 %v656
    %670 = vmatpush.msra.mxu0 %v655
    %671 = vmatpush.msra.mxu0 %v654
    %672 = vmatpush.msra.mxu0 %v653
    %673 = vmatpush.msra.mxu0 %v652
    %674 = vmatpush.msra.mxu0 %v651
    %675 = vmatpush.msra.mxu0 %v650
    %676 = vmatpush.msra.mxu0 %v649
    %677 = vmatmul.f32.gmra.mxu0 %v460
    %v678 = vpop.f32.mrf.mxu0
    %v679 = vadd.f32 %v659, %v678
    %680 = vmatmul.f32.gmra.mxu0 %v463
    %v681 = vpop.f32.mrf.mxu0
    %v682 = vadd.f32 %v659, %v681
    %683 = vmatmul.f32.gmra.mxu0 %v466
    %v684 = vpop.f32.mrf.mxu0
    %v685 = vadd.f32 %v659, %v684
    %686 = vmatmul.f32.gmra.mxu0 %v469
    %v687 = vpop.f32.mrf.mxu0
    %v688 = vadd.f32 %v659, %v687
    %689 = vmatmul.f32.gmra.mxu0 %v472
    %v690 = vpop.f32.mrf.mxu0
    %v691 = vadd.f32 %v659, %v690
    %692 = vmatmul.f32.gmra.mxu0 %v475
    %v693 = vpop.f32.mrf.mxu0
    %v694 = vadd.f32 %v659, %v693
    %695 = vmatmul.f32.gmra.mxu0 %v478
    %v696 = vpop.f32.mrf.mxu0
    %v697 = vadd.f32 %v659, %v696
    %698 = vmatmul.f32.gmra.mxu0 %v481
    %v699 = vpop.f32.mrf.mxu0
    %v700 = vadd.f32 %v659, %v699
    %701 = vmatmul.f32.gmra.mxu0 %v484
    %v702 = vpop.f32.mrf.mxu0
    %v703 = vadd.f32 %v659, %v702
    %704 = vmatmul.f32.gmra.mxu0 %v487
    %v705 = vpop.f32.mrf.mxu0
    %v706 = vadd.f32 %v659, %v705
    %707 = vmatmul.f32.gmra.mxu0 %v490
    %v708 = vpop.f32.mrf.mxu0
    %v709 = vadd.f32 %v659, %v708
    %710 = vmatmul.f32.gmra.mxu0 %v493
    %v711 = vpop.f32.mrf.mxu0
    %v712 = vadd.f32 %v659, %v711
    %713 = vmatmul.f32.gmra.mxu0 %v496
    %v714 = vpop.f32.mrf.mxu0
    %v715 = vadd.f32 %v659, %v714
    %716 = vmatmul.f32.gmra.mxu0 %v499
    %v717 = vpop.f32.mrf.mxu0
    %v718 = vadd.f32 %v659, %v717
    %719 = vmatmul.f32.gmra.mxu0 %v502
    %v720 = vpop.f32.mrf.mxu0
    %v721 = vadd.f32 %v659, %v720
    %722 = vmatmul.f32.gmra.mxu0 %v505
    %v723 = vpop.f32.mrf.mxu0
    %v724 = vadd.f32 %v659, %v723
    %725 = vdwg.mxu0
    %v727 = vsel %vm217, %v525, 0
    %v730 = vsel %vm217, %v528, 0
    %v733 = vsel %vm217, %v531, 0
    %v736 = vsel %vm217, %v534, 0
    %v739 = vsel %vm217, %v537, 0
    %v742 = vsel %vm217, %v540, 0
    %v745 = vsel %vm217, %v543, 0
    %v748 = vsel %vm217, %v546, 0
    %v751 = vsel %vm217, %v602, 0
    %v754 = vsel %vm217, %v605, 0
    %v757 = vsel %vm217, %v608, 0
    %v760 = vsel %vm217, %v611, 0
    %v763 = vsel %vm217, %v614, 0
    %v766 = vsel %vm217, %v617, 0
    %v769 = vsel %vm217, %v620, 0
    %v772 = vsel %vm217, %v623, 0
    %774 = vmatpush.xpose.msra.mxu0 0.0
    %775 = vmatpush.xpose.msra.mxu0 0.0
    %776 = vmatpush.xpose.msra.mxu0 0.0
    %777 = vmatpush.xpose.msra.mxu0 0.0
    %778 = vmatpush.xpose.msra.mxu0 0.0
    %779 = vmatpush.xpose.msra.mxu0 0.0
    %780 = vmatpush.xpose.msra.mxu0 0.0
    %781 = vmatpush.xpose.msra.mxu0 0.0
    %782 = vmatpush.xpose.msra.mxu0 %v772
    %783 = vmatpush.xpose.msra.mxu0 %v769
    %784 = vmatpush.xpose.msra.mxu0 %v766
    %785 = vmatpush.xpose.msra.mxu0 %v763
    %786 = vmatpush.xpose.msra.mxu0 %v760
    %787 = vmatpush.xpose.msra.mxu0 %v757
    %788 = vmatpush.xpose.msra.mxu0 %v754
    %789 = vmatpush.xpose.msra.mxu0 %v751
    %790 = vmatmul.f32.gmra.mxu0 %v727
    %v791 = vpop.f32.mrf.mxu0
    %v792 = vadd.f32 0.0, %v791
    %793 = vmatmul.f32.gmra.mxu0 %v730
    %v794 = vpop.f32.mrf.mxu0
    %v795 = vadd.f32 0.0, %v794
    %796 = vmatmul.f32.gmra.mxu0 %v733
    %v797 = vpop.f32.mrf.mxu0
    %v798 = vadd.f32 0.0, %v797
    %799 = vmatmul.f32.gmra.mxu0 %v736
    %v800 = vpop.f32.mrf.mxu0
    %v801 = vadd.f32 0.0, %v800
    %802 = vmatmul.f32.gmra.mxu0 %v739
    %v803 = vpop.f32.mrf.mxu0
    %v804 = vadd.f32 0.0, %v803
    %805 = vmatmul.f32.gmra.mxu0 %v742
    %v806 = vpop.f32.mrf.mxu0
    %v807 = vadd.f32 0.0, %v806
    %808 = vmatmul.f32.gmra.mxu0 %v745
    %v809 = vpop.f32.mrf.mxu0
    %v810 = vadd.f32 0.0, %v809
    %811 = vmatmul.f32.gmra.mxu0 %v748
    %v812 = vpop.f32.mrf.mxu0
    %v813 = vadd.f32 0.0, %v812
    %814 = vdwg.mxu0
    %v816 = vsel %vm217, %v549, 0
    %v819 = vsel %vm217, %v552, 0
    %v822 = vsel %vm217, %v555, 0
    %v825 = vsel %vm217, %v558, 0
    %v828 = vsel %vm217, %v561, 0
    %v831 = vsel %vm217, %v564, 0
    %v834 = vsel %vm217, %v567, 0
    %v837 = vsel %vm217, %v570, 0
    %v840 = vsel %vm217, %v626, 0
    %v843 = vsel %vm217, %v629, 0
    %v846 = vsel %vm217, %v632, 0
    %v849 = vsel %vm217, %v635, 0
    %v852 = vsel %vm217, %v638, 0
    %v855 = vsel %vm217, %v641, 0
    %v858 = vsel %vm217, %v644, 0
    %v861 = vsel %vm217, %v647, 0
    %863 = vmatpush.xpose.msra.mxu0 0.0
    %864 = vmatpush.xpose.msra.mxu0 0.0
    %865 = vmatpush.xpose.msra.mxu0 0.0
    %866 = vmatpush.xpose.msra.mxu0 0.0
    %867 = vmatpush.xpose.msra.mxu0 0.0
    %868 = vmatpush.xpose.msra.mxu0 0.0
    %869 = vmatpush.xpose.msra.mxu0 0.0
    %870 = vmatpush.xpose.msra.mxu0 0.0
    %871 = vmatpush.xpose.msra.mxu0 %v861
    %872 = vmatpush.xpose.msra.mxu0 %v858
    %873 = vmatpush.xpose.msra.mxu0 %v855
    %874 = vmatpush.xpose.msra.mxu0 %v852
    %875 = vmatpush.xpose.msra.mxu0 %v849
    %876 = vmatpush.xpose.msra.mxu0 %v846
    %877 = vmatpush.xpose.msra.mxu0 %v843
    %878 = vmatpush.xpose.msra.mxu0 %v840
    %879 = vmatmul.f32.gmra.mxu0 %v816
    %v880 = vpop.f32.mrf.mxu0
    %v881 = vadd.f32 0.0, %v880
    %882 = vmatmul.f32.gmra.mxu0 %v819
    %v883 = vpop.f32.mrf.mxu0
    %v884 = vadd.f32 0.0, %v883
    %885 = vmatmul.f32.gmra.mxu0 %v822
    %v886 = vpop.f32.mrf.mxu0
    %v887 = vadd.f32 0.0, %v886
    %888 = vmatmul.f32.gmra.mxu0 %v825
    %v889 = vpop.f32.mrf.mxu0
    %v890 = vadd.f32 0.0, %v889
    %891 = vmatmul.f32.gmra.mxu0 %v828
    %v892 = vpop.f32.mrf.mxu0
    %v893 = vadd.f32 0.0, %v892
    %894 = vmatmul.f32.gmra.mxu0 %v831
    %v895 = vpop.f32.mrf.mxu0
    %v896 = vadd.f32 0.0, %v895
    %897 = vmatmul.f32.gmra.mxu0 %v834
    %v898 = vpop.f32.mrf.mxu0
    %v899 = vadd.f32 0.0, %v898
    %900 = vmatmul.f32.gmra.mxu0 %v837
    %v901 = vpop.f32.mrf.mxu0
    %v902 = vadd.f32 0.0, %v901
    %903 = vdwg.mxu0
    %v904 = vmul.f32 %v792, 0.125
    %v905 = vmul.f32 %v795, 0.125
    %v906 = vmul.f32 %v798, 0.125
    %v907 = vmul.f32 %v801, 0.125
    %v908 = vmul.f32 %v804, 0.125
    %v909 = vmul.f32 %v807, 0.125
    %v910 = vmul.f32 %v810, 0.125
    %v911 = vmul.f32 %v813, 0.125
    %v912 = vmul.f32 %v881, 0.125
    %v913 = vmul.f32 %v884, 0.125
    %v914 = vmul.f32 %v887, 0.125
    %v915 = vmul.f32 %v890, 0.125
    %v916 = vmul.f32 %v893, 0.125
    %v917 = vmul.f32 %v896, 0.125
    %v918 = vmul.f32 %v899, 0.125
    %v919 = vmul.f32 %v902, 0.125
    %v920 = vsel %vm217, %v904, -inf
    %921 = vmax.xlane.f32.xlu0 %v920
    %v922 = vpop.xlane.xlu0 %921
    %v923 = vsel %vm217, %v905, -inf
    %924 = vmax.xlane.f32.xlu0 %v923
    %v925 = vpop.xlane.xlu0 %924
    %v926 = vsel %vm217, %v906, -inf
    %927 = vmax.xlane.f32.xlu0 %v926
    %v928 = vpop.xlane.xlu0 %927
    %v929 = vsel %vm217, %v907, -inf
    %930 = vmax.xlane.f32.xlu0 %v929
    %v931 = vpop.xlane.xlu0 %930
    %v932 = vsel %vm217, %v908, -inf
    %933 = vmax.xlane.f32.xlu0 %v932
    %v934 = vpop.xlane.xlu0 %933
    %v935 = vsel %vm217, %v909, -inf
    %936 = vmax.xlane.f32.xlu0 %v935
    %v937 = vpop.xlane.xlu0 %936
    %v938 = vsel %vm217, %v910, -inf
    %939 = vmax.xlane.f32.xlu0 %v938
    %v940 = vpop.xlane.xlu0 %939
    %v941 = vsel %vm217, %v911, -inf
    %942 = vmax.xlane.f32.xlu0 %v941
    %v943 = vpop.xlane.xlu0 %942
    %v944 = vsel %vm217, %v912, -inf
    %945 = vmax.xlane.f32.xlu0 %v944
    %v946 = vpop.xlane.xlu0 %945
    %v947 = vsel %vm217, %v913, -inf
    %948 = vmax.xlane.f32.xlu0 %v947
    %v949 = vpop.xlane.xlu0 %948
    %v950 = vsel %vm217, %v914, -inf
    %951 = vmax.xlane.f32.xlu0 %v950
    %v952 = vpop.xlane.xlu0 %951
    %v953 = vsel %vm217, %v915, -inf
    %954 = vmax.xlane.f32.xlu0 %v953
    %v955 = vpop.xlane.xlu0 %954
    %v956 = vsel %vm217, %v916, -inf
    %957 = vmax.xlane.f32.xlu0 %v956
    %v958 = vpop.xlane.xlu0 %957
    %v959 = vsel %vm217, %v917, -inf
    %960 = vmax.xlane.f32.xlu0 %v959
    %v961 = vpop.xlane.xlu0 %960
    %v962 = vsel %vm217, %v918, -inf
    %963 = vmax.xlane.f32.xlu0 %v962
    %v964 = vpop.xlane.xlu0 %963
    %v965 = vsel %vm217, %v919, -inf
    %966 = vmax.xlane.f32.xlu0 %v965
    %v967 = vpop.xlane.xlu0 %966
    %v968 = vsub.f32 %v904, %v922
    %v969 = vsub.f32 %v905, %v925
    %v970 = vsub.f32 %v906, %v928
    %v971 = vsub.f32 %v907, %v931
    %v972 = vsub.f32 %v908, %v934
    %v973 = vsub.f32 %v909, %v937
    %v974 = vsub.f32 %v910, %v940
    %v975 = vsub.f32 %v911, %v943
    %v976 = vsub.f32 %v912, %v946
    %v977 = vsub.f32 %v913, %v949
    %v978 = vsub.f32 %v914, %v952
    %v979 = vsub.f32 %v915, %v955
    %v980 = vsub.f32 %v916, %v958
    %v981 = vsub.f32 %v917, %v961
    %v982 = vsub.f32 %v918, %v964
    %v983 = vsub.f32 %v919, %v967
    %v984 = vmul.f32 %v968, 1.442695
    %v985 = vpow.pop %v984
    %v986 = vmul.f32 %v969, 1.442695
    %v987 = vpow.pop %v986
    %v988 = vmul.f32 %v970, 1.442695
    %v989 = vpow.pop %v988
    %v990 = vmul.f32 %v971, 1.442695
    %v991 = vpow.pop %v990
    %v992 = vmul.f32 %v972, 1.442695
    %v993 = vpow.pop %v992
    %v994 = vmul.f32 %v973, 1.442695
    %v995 = vpow.pop %v994
    %v996 = vmul.f32 %v974, 1.442695
    %v997 = vpow.pop %v996
    %v998 = vmul.f32 %v975, 1.442695
    %v999 = vpow.pop %v998
    %v1000 = vmul.f32 %v976, 1.442695
    %v1001 = vpow.pop %v1000
    %v1002 = vmul.f32 %v977, 1.442695
    %v1003 = vpow.pop %v1002
    %v1004 = vmul.f32 %v978, 1.442695
    %v1005 = vpow.pop %v1004
    %v1006 = vmul.f32 %v979, 1.442695
    %v1007 = vpow.pop %v1006
    %v1008 = vmul.f32 %v980, 1.442695
    %v1009 = vpow.pop %v1008
    %v1010 = vmul.f32 %v981, 1.442695
    %v1011 = vpow.pop %v1010
    %v1012 = vmul.f32 %v982, 1.442695
    %v1013 = vpow.pop %v1012
    %v1014 = vmul.f32 %v983, 1.442695
    %v1015 = vpow.pop %v1014
    %v1016 = vsel %vm217, %v985, 0.0
    %1017 = vadd.xlane.f32.xlu0 %v1016
    %v1018 = vpop.xlane.xlu0 %1017
    %v1019 = vsel %vm217, %v987, 0.0
    %1020 = vadd.xlane.f32.xlu0 %v1019
    %v1021 = vpop.xlane.xlu0 %1020
    %v1022 = vsel %vm217, %v989, 0.0
    %1023 = vadd.xlane.f32.xlu0 %v1022
    %v1024 = vpop.xlane.xlu0 %1023
    %v1025 = vsel %vm217, %v991, 0.0
    %1026 = vadd.xlane.f32.xlu0 %v1025
    %v1027 = vpop.xlane.xlu0 %1026
    %v1028 = vsel %vm217, %v993, 0.0
    %1029 = vadd.xlane.f32.xlu0 %v1028
    %v1030 = vpop.xlane.xlu0 %1029
    %v1031 = vsel %vm217, %v995, 0.0
    %1032 = vadd.xlane.f32.xlu0 %v1031
    %v1033 = vpop.xlane.xlu0 %1032
    %v1034 = vsel %vm217, %v997, 0.0
    %1035 = vadd.xlane.f32.xlu0 %v1034
    %v1036 = vpop.xlane.xlu0 %1035
    %v1037 = vsel %vm217, %v999, 0.0
    %1038 = vadd.xlane.f32.xlu0 %v1037
    %v1039 = vpop.xlane.xlu0 %1038
    %v1040 = vsel %vm217, %v1001, 0.0
    %1041 = vadd.xlane.f32.xlu0 %v1040
    %v1042 = vpop.xlane.xlu0 %1041
    %v1043 = vsel %vm217, %v1003, 0.0
    %1044 = vadd.xlane.f32.xlu0 %v1043
    %v1045 = vpop.xlane.xlu0 %1044
    %v1046 = vsel %vm217, %v1005, 0.0
    %1047 = vadd.xlane.f32.xlu0 %v1046
    %v1048 = vpop.xlane.xlu0 %1047
    %v1049 = vsel %vm217, %v1007, 0.0
    %1050 = vadd.xlane.f32.xlu0 %v1049
    %v1051 = vpop.xlane.xlu0 %1050
    %v1052 = vsel %vm217, %v1009, 0.0
    %1053 = vadd.xlane.f32.xlu0 %v1052
    %v1054 = vpop.xlane.xlu0 %1053
    %v1055 = vsel %vm217, %v1011, 0.0
    %1056 = vadd.xlane.f32.xlu0 %v1055
    %v1057 = vpop.xlane.xlu0 %1056
    %v1058 = vsel %vm217, %v1013, 0.0
    %1059 = vadd.xlane.f32.xlu0 %v1058
    %v1060 = vpop.xlane.xlu0 %1059
    %v1061 = vsel %vm217, %v1015, 0.0
    %1062 = vadd.xlane.f32.xlu0 %v1061
    %v1063 = vpop.xlane.xlu0 %1062
    %v1064 = vrcp.pop %v1018
    %v1065 = vrcp.pop %v1021
    %v1066 = vrcp.pop %v1024
    %v1067 = vrcp.pop %v1027
    %v1068 = vrcp.pop %v1030
    %v1069 = vrcp.pop %v1033
    %v1070 = vrcp.pop %v1036
    %v1071 = vrcp.pop %v1039
    %v1072 = vrcp.pop %v1042
    %v1073 = vrcp.pop %v1045
    %v1074 = vrcp.pop %v1048
    %v1075 = vrcp.pop %v1051
    %v1076 = vrcp.pop %v1054
    %v1077 = vrcp.pop %v1057
    %v1078 = vrcp.pop %v1060
    %v1079 = vrcp.pop %v1063
    %v1080 = vmul.f32 %v985, %v1064
    %v1081 = vmul.f32 %v987, %v1065
    %v1082 = vmul.f32 %v989, %v1066
    %v1083 = vmul.f32 %v991, %v1067
    %v1084 = vmul.f32 %v993, %v1068
    %v1085 = vmul.f32 %v995, %v1069
    %v1086 = vmul.f32 %v997, %v1070
    %v1087 = vmul.f32 %v999, %v1071
    %v1088 = vmul.f32 %v1001, %v1072
    %v1089 = vmul.f32 %v1003, %v1073
    %v1090 = vmul.f32 %v1005, %v1074
    %v1091 = vmul.f32 %v1007, %v1075
    %v1092 = vmul.f32 %v1009, %v1076
    %v1093 = vmul.f32 %v1011, %v1077
    %v1094 = vmul.f32 %v1013, %v1078
    %v1095 = vmul.f32 %v1015, %v1079
    %v1097 = vsel %vm217, %v1080, 0
    %v1100 = vsel %vm217, %v1081, 0
    %v1103 = vsel %vm217, %v1082, 0
    %v1106 = vsel %vm217, %v1083, 0
    %v1109 = vsel %vm217, %v1084, 0
    %v1112 = vsel %vm217, %v1085, 0
    %v1115 = vsel %vm217, %v1086, 0
    %v1118 = vsel %vm217, %v1087, 0
    %1120 = vmatpush.msra.mxu0 0.0
    %1121 = vmatpush.msra.mxu0 0.0
    %1122 = vmatpush.msra.mxu0 0.0
    %1123 = vmatpush.msra.mxu0 0.0
    %1124 = vmatpush.msra.mxu0 0.0
    %1125 = vmatpush.msra.mxu0 0.0
    %1126 = vmatpush.msra.mxu0 0.0
    %1127 = vmatpush.msra.mxu0 0.0
    %1128 = vmatpush.msra.mxu0 %v700
    %1129 = vmatpush.msra.mxu0 %v697
    %1130 = vmatpush.msra.mxu0 %v694
    %1131 = vmatpush.msra.mxu0 %v691
    %1132 = vmatpush.msra.mxu0 %v688
    %1133 = vmatpush.msra.mxu0 %v685
    %1134 = vmatpush.msra.mxu0 %v682
    %1135 = vmatpush.msra.mxu0 %v679
    %1136 = vmatmul.f32.gmra.mxu0 %v1097
    %v1137 = vpop.f32.mrf.mxu0
    %v1138 = vadd.f32 0.0, %v1137
    %1139 = vmatmul.f32.gmra.mxu0 %v1100
    %v1140 = vpop.f32.mrf.mxu0
    %v1141 = vadd.f32 0.0, %v1140
    %1142 = vmatmul.f32.gmra.mxu0 %v1103
    %v1143 = vpop.f32.mrf.mxu0
    %v1144 = vadd.f32 0.0, %v1143
    %1145 = vmatmul.f32.gmra.mxu0 %v1106
    %v1146 = vpop.f32.mrf.mxu0
    %v1147 = vadd.f32 0.0, %v1146
    %1148 = vmatmul.f32.gmra.mxu0 %v1109
    %v1149 = vpop.f32.mrf.mxu0
    %v1150 = vadd.f32 0.0, %v1149
    %1151 = vmatmul.f32.gmra.mxu0 %v1112
    %v1152 = vpop.f32.mrf.mxu0
    %v1153 = vadd.f32 0.0, %v1152
    %1154 = vmatmul.f32.gmra.mxu0 %v1115
    %v1155 = vpop.f32.mrf.mxu0
    %v1156 = vadd.f32 0.0, %v1155
    %1157 = vmatmul.f32.gmra.mxu0 %v1118
    %v1158 = vpop.f32.mrf.mxu0
    %v1159 = vadd.f32 0.0, %v1158
    %1160 = vdwg.mxu0
    %v1162 = vsel %vm217, %v1088, 0
    %v1165 = vsel %vm217, %v1089, 0
    %v1168 = vsel %vm217, %v1090, 0
    %v1171 = vsel %vm217, %v1091, 0
    %v1174 = vsel %vm217, %v1092, 0
    %v1177 = vsel %vm217, %v1093, 0
    %v1180 = vsel %vm217, %v1094, 0
    %v1183 = vsel %vm217, %v1095, 0
    %1185 = vmatpush.msra.mxu0 0.0
    %1186 = vmatpush.msra.mxu0 0.0
    %1187 = vmatpush.msra.mxu0 0.0
    %1188 = vmatpush.msra.mxu0 0.0
    %1189 = vmatpush.msra.mxu0 0.0
    %1190 = vmatpush.msra.mxu0 0.0
    %1191 = vmatpush.msra.mxu0 0.0
    %1192 = vmatpush.msra.mxu0 0.0
    %1193 = vmatpush.msra.mxu0 %v724
    %1194 = vmatpush.msra.mxu0 %v721
    %1195 = vmatpush.msra.mxu0 %v718
    %1196 = vmatpush.msra.mxu0 %v715
    %1197 = vmatpush.msra.mxu0 %v712
    %1198 = vmatpush.msra.mxu0 %v709
    %1199 = vmatpush.msra.mxu0 %v706
    %1200 = vmatpush.msra.mxu0 %v703
    %1201 = vmatmul.f32.gmra.mxu0 %v1162
    %v1202 = vpop.f32.mrf.mxu0
    %v1203 = vadd.f32 0.0, %v1202
    %1204 = vmatmul.f32.gmra.mxu0 %v1165
    %v1205 = vpop.f32.mrf.mxu0
    %v1206 = vadd.f32 0.0, %v1205
    %1207 = vmatmul.f32.gmra.mxu0 %v1168
    %v1208 = vpop.f32.mrf.mxu0
    %v1209 = vadd.f32 0.0, %v1208
    %1210 = vmatmul.f32.gmra.mxu0 %v1171
    %v1211 = vpop.f32.mrf.mxu0
    %v1212 = vadd.f32 0.0, %v1211
    %1213 = vmatmul.f32.gmra.mxu0 %v1174
    %v1214 = vpop.f32.mrf.mxu0
    %v1215 = vadd.f32 0.0, %v1214
    %1216 = vmatmul.f32.gmra.mxu0 %v1177
    %v1217 = vpop.f32.mrf.mxu0
    %v1218 = vadd.f32 0.0, %v1217
    %1219 = vmatmul.f32.gmra.mxu0 %v1180
    %v1220 = vpop.f32.mrf.mxu0
    %v1221 = vadd.f32 0.0, %v1220
    %1222 = vmatmul.f32.gmra.mxu0 %v1183
    %v1223 = vpop.f32.mrf.mxu0
    %v1224 = vadd.f32 0.0, %v1223
    %1225 = vdwg.mxu0
    %v1226 = vld [vmem:[#allocation11] sm:$0xff]
    %v1227 = vld [vmem:[#allocation11 + $0x8] sm:$0xff]
    %v1228 = vld [vmem:[#allocation11 + $0x10] sm:$0xff]
    %v1229 = vld [vmem:[#allocation11 + $0x18] sm:$0xff]
    %v1230 = vld [vmem:[#allocation11 + $0x20] sm:$0xff]
    %v1231 = vld [vmem:[#allocation11 + $0x28] sm:$0xff]
    %v1232 = vld [vmem:[#allocation11 + $0x30] sm:$0xff]
    %v1233 = vld [vmem:[#allocation11 + $0x38] sm:$0xff]
    %v1234 = vld [vmem:[%s11] sm:$0x1]
    %v1236 = vperm.slane %v1234, 0
    %v1239 = vsel %vm217, %v1138, 0
    %v1242 = vsel %vm217, %v1141, 0
    %v1245 = vsel %vm217, %v1144, 0
    %v1248 = vsel %vm217, %v1147, 0
    %v1251 = vsel %vm217, %v1150, 0
    %v1254 = vsel %vm217, %v1153, 0
    %v1257 = vsel %vm217, %v1156, 0
    %v1260 = vsel %vm217, %v1159, 0
    %v1263 = vsel %vm217, %v1203, 0
    %v1266 = vsel %vm217, %v1206, 0
    %v1269 = vsel %vm217, %v1209, 0
    %v1272 = vsel %vm217, %v1212, 0
    %v1275 = vsel %vm217, %v1215, 0
    %v1278 = vsel %vm217, %v1218, 0
    %v1281 = vsel %vm217, %v1221, 0
    %v1284 = vsel %vm217, %v1224, 0
    %1286 = vmatpush.msra.mxu0 0.0
    %1287 = vmatpush.msra.mxu0 0.0
    %1288 = vmatpush.msra.mxu0 0.0
    %1289 = vmatpush.msra.mxu0 0.0
    %1290 = vmatpush.msra.mxu0 0.0
    %1291 = vmatpush.msra.mxu0 0.0
    %1292 = vmatpush.msra.mxu0 0.0
    %1293 = vmatpush.msra.mxu0 0.0
    %1294 = vmatpush.msra.mxu0 %v1233
    %1295 = vmatpush.msra.mxu0 %v1232
    %1296 = vmatpush.msra.mxu0 %v1231
    %1297 = vmatpush.msra.mxu0 %v1230
    %1298 = vmatpush.msra.mxu0 %v1229
    %1299 = vmatpush.msra.mxu0 %v1228
    %1300 = vmatpush.msra.mxu0 %v1227
    %1301 = vmatpush.msra.mxu0 %v1226
    %1302 = vmatmul.f32.gmra.mxu0 %v1239
    %v1303 = vpop.f32.mrf.mxu0
    %v1304 = vadd.f32 %v1236, %v1303
    %1305 = vmatmul.f32.gmra.mxu0 %v1242
    %v1306 = vpop.f32.mrf.mxu0
    %v1307 = vadd.f32 %v1236, %v1306
    %1308 = vmatmul.f32.gmra.mxu0 %v1245
    %v1309 = vpop.f32.mrf.mxu0
    %v1310 = vadd.f32 %v1236, %v1309
    %1311 = vmatmul.f32.gmra.mxu0 %v1248
    %v1312 = vpop.f32.mrf.mxu0
    %v1313 = vadd.f32 %v1236, %v1312
    %1314 = vmatmul.f32.gmra.mxu0 %v1251
    %v1315 = vpop.f32.mrf.mxu0
    %v1316 = vadd.f32 %v1236, %v1315
    %1317 = vmatmul.f32.gmra.mxu0 %v1254
    %v1318 = vpop.f32.mrf.mxu0
    %v1319 = vadd.f32 %v1236, %v1318
    %1320 = vmatmul.f32.gmra.mxu0 %v1257
    %v1321 = vpop.f32.mrf.mxu0
    %v1322 = vadd.f32 %v1236, %v1321
    %1323 = vmatmul.f32.gmra.mxu0 %v1260
    %v1324 = vpop.f32.mrf.mxu0
    %v1325 = vadd.f32 %v1236, %v1324
    %1326 = vmatmul.f32.gmra.mxu0 %v1263
    %v1327 = vpop.f32.mrf.mxu0
    %v1328 = vadd.f32 %v1236, %v1327
    %1329 = vmatmul.f32.gmra.mxu0 %v1266
    %v1330 = vpop.f32.mrf.mxu0
    %v1331 = vadd.f32 %v1236, %v1330
    %1332 = vmatmul.f32.gmra.mxu0 %v1269
    %v1333 = vpop.f32.mrf.mxu0
    %v1334 = vadd.f32 %v1236, %v1333
    %1335 = vmatmul.f32.gmra.mxu0 %v1272
    %v1336 = vpop.f32.mrf.mxu0
    %v1337 = vadd.f32 %v1236, %v1336
    %1338 = vmatmul.f32.gmra.mxu0 %v1275
    %v1339 = vpop.f32.mrf.mxu0
    %v1340 = vadd.f32 %v1236, %v1339
    %1341 = vmatmul.f32.gmra.mxu0 %v1278
    %v1342 = vpop.f32.mrf.mxu0
    %v1343 = vadd.f32 %v1236, %v1342
    %1344 = vmatmul.f32.gmra.mxu0 %v1281
    %v1345 = vpop.f32.mrf.mxu0
    %v1346 = vadd.f32 %v1236, %v1345
    %1347 = vmatmul.f32.gmra.mxu0 %v1284
    %v1348 = vpop.f32.mrf.mxu0
    %v1349 = vadd.f32 %v1236, %v1348
    %1350 = vdwg.mxu0
    %1351 = vxpose.xlu0.b32.start [1/16] %v1304, 128
    %1352 = vxpose.xlu0.b32.cont [2/16] %v1307, 128
    %1353 = vxpose.xlu0.b32.cont [3/16] %v1310, 128
    %1354 = vxpose.xlu0.b32.cont [4/16] %v1313, 128
    %1355 = vxpose.xlu0.b32.cont [5/16] %v1316, 128
    %1356 = vxpose.xlu0.b32.cont [6/16] %v1319, 128
    %1357 = vxpose.xlu0.b32.cont [7/16] %v1322, 128
    %1358 = vxpose.xlu0.b32.cont [8/16] %v1325, 128
    %1359 = vxpose.xlu0.b32.cont [9/16] 0.0, 128
    %1360 = vxpose.xlu0.b32.cont [10/16] 0.0, 128
    %1361 = vxpose.xlu0.b32.cont [11/16] 0.0, 128
    %1362 = vxpose.xlu0.b32.cont [12/16] 0.0, 128
    %1363 = vxpose.xlu0.b32.cont [13/16] 0.0, 128
    %1364 = vxpose.xlu0.b32.cont [14/16] 0.0, 128
    %1365 = vxpose.xlu0.b32.cont [15/16] 0.0, 128
    %1366 = vxpose.xlu0.b32.end [16/16] 0.0, 128
    %v1367 = vpop.trf.xlu0
    %v1368 = vpop.trf.xlu0
    %v1369 = vpop.trf.xlu0
    %v1370 = vpop.trf.xlu0
    %v1371 = vpop.trf.xlu0
    %v1372 = vpop.trf.xlu0
    %v1373 = vpop.trf.xlu0
    %v1374 = vpop.trf.xlu0
    %v1375 = vpop.trf.xlu0
    %v1376 = vpop.trf.xlu0
    %v1377 = vpop.trf.xlu0
    %v1378 = vpop.trf.xlu0
    %v1379 = vpop.trf.xlu0
    %v1380 = vpop.trf.xlu0
    %v1381 = vpop.trf.xlu0
    %v1382 = vpop.trf.xlu0
    %v1383 = vadd.f32 %v1367, %v136
    %v1384 = vadd.f32 %v1368, %v137
    %v1385 = vadd.f32 %v1369, %v138
    %v1386 = vadd.f32 %v1370, %v139
    %v1387 = vadd.f32 %v1371, %v140
    %v1388 = vadd.f32 %v1372, %v141
    %v1389 = vadd.f32 %v1373, %v142
    %v1390 = vadd.f32 %v1374, %v143
    %1391 = vst.msk [vmem:[#allocation13] sm:$0xff] %vm217, %v1383
    %1392 = vst.msk [vmem:[#allocation13 + $0x8] sm:$0xff] %vm217, %v1384
    %1393 = vst.msk [vmem:[#allocation13 + $0x10] sm:$0xff] %vm217, %v1385
    %1394 = vst.msk [vmem:[#allocation13 + $0x18] sm:$0xff] %vm217, %v1386
    %1395 = vst.msk [vmem:[#allocation13 + $0x20] sm:$0xff] %vm217, %v1387
    %1396 = vst.msk [vmem:[#allocation13 + $0x28] sm:$0xff] %vm217, %v1388
    %1397 = vst.msk [vmem:[#allocation13 + $0x30] sm:$0xff] %vm217, %v1389
    %1398 = vst.msk [vmem:[#allocation13 + $0x38] sm:$0xff] %vm217, %v1390
    %1399 = vxpose.xlu0.b32.start [1/16] %v1328, 128
    %1400 = vxpose.xlu0.b32.cont [2/16] %v1331, 128
    %1401 = vxpose.xlu0.b32.cont [3/16] %v1334, 128
    %1402 = vxpose.xlu0.b32.cont [4/16] %v1337, 128
    %1403 = vxpose.xlu0.b32.cont [5/16] %v1340, 128
    %1404 = vxpose.xlu0.b32.cont [6/16] %v1343, 128
    %1405 = vxpose.xlu0.b32.cont [7/16] %v1346, 128
    %1406 = vxpose.xlu0.b32.cont [8/16] %v1349, 128
    %1407 = vxpose.xlu0.b32.cont [9/16] 0.0, 128
    %1408 = vxpose.xlu0.b32.cont [10/16] 0.0, 128
    %1409 = vxpose.xlu0.b32.cont [11/16] 0.0, 128
    %1410 = vxpose.xlu0.b32.cont [12/16] 0.0, 128
    %1411 = vxpose.xlu0.b32.cont [13/16] 0.0, 128
    %1412 = vxpose.xlu0.b32.cont [14/16] 0.0, 128
    %1413 = vxpose.xlu0.b32.cont [15/16] 0.0, 128
    %1414 = vxpose.xlu0.b32.end [16/16] 0.0, 128
    %v1415 = vpop.trf.xlu0
    %v1416 = vpop.trf.xlu0
    %v1417 = vpop.trf.xlu0
    %v1418 = vpop.trf.xlu0
    %v1419 = vpop.trf.xlu0
    %v1420 = vpop.trf.xlu0
    %v1421 = vpop.trf.xlu0
    %v1422 = vpop.trf.xlu0
    %v1423 = vpop.trf.xlu0
    %v1424 = vpop.trf.xlu0
    %v1425 = vpop.trf.xlu0
    %v1426 = vpop.trf.xlu0
    %v1427 = vpop.trf.xlu0
    %v1428 = vpop.trf.xlu0
    %v1429 = vpop.trf.xlu0
    %v1430 = vpop.trf.xlu0
    %v1431 = vadd.f32 %v1415, %v145
    %v1432 = vadd.f32 %v1416, %v146
    %v1433 = vadd.f32 %v1417, %v147
    %v1434 = vadd.f32 %v1418, %v148
    %v1435 = vadd.f32 %v1419, %v149
    %v1436 = vadd.f32 %v1420, %v150
    %v1437 = vadd.f32 %v1421, %v151
    %v1438 = vadd.f32 %v1422, %v152
    %s1439 = scalar_lea.vmem [#allocation13], 64
    %1440 = vst.msk [vmem:[%s1439] sm:$0xff] %vm217, %v1431
    %1441 = vst.msk [vmem:[%s1439 + $0x8] sm:$0xff] %vm217, %v1432
    %1442 = vst.msk [vmem:[%s1439 + $0x10] sm:$0xff] %vm217, %v1433
    %1443 = vst.msk [vmem:[%s1439 + $0x18] sm:$0xff] %vm217, %v1434
    %1444 = vst.msk [vmem:[%s1439 + $0x20] sm:$0xff] %vm217, %v1435
    %1445 = vst.msk [vmem:[%s1439 + $0x28] sm:$0xff] %vm217, %v1436
    %1446 = vst.msk [vmem:[%s1439 + $0x30] sm:$0xff] %vm217, %v1437
    %1447 = vst.msk [vmem:[%s1439 + $0x38] sm:$0xff] %vm217, %v1438
    // Predicated region
    $region74: #{tpu_custom_call.1} parent=1 // pred_check
      _
    $region75: #{tpu_custom_call.1} parent=1 // pred_check_branch
      %1449 = sbr.rel (0) target = $region77
    $region76: #{tpu_custom_call.1} parent=1 // pred_region
      %1451 = vsyncadd [#allocation4], 0
      %s1452 = sshll.u32 [#allocation13], 4
      %s1453 = int_to_ptr.vmem [resolvable:$true] %s1452
      %s1454 = sshll.u32 %s12, 4
      %s1455 = int_to_ptr.hbm [resolvable:$true] %s1454
      %1460 = dma.vmem_to_hbm [thread:$0]  %s1453, 2048, %s1455, [#allocation4], 128, 128, 8
    $region77: #{tpu_custom_call.1} parent=1 // pred_fallthru
      _
    // Predicated region
    $region78: #{tpu_custom_call.1} parent=1 // pred_check
      _
    $region79: #{tpu_custom_call.1} parent=1 // pred_check_branch
      %1462 = sbr.rel (0) target = $region81
    $region80: #{tpu_custom_call.1} parent=1 // pred_region
      %1464 = dma.done [#allocation4], 2048
    $region81: #{tpu_custom_call.1} parent=1 // pred_fallthru
      _
    %1465 = vsyncpa [#allocation3], 1
    %1466 = vsyncpa [#allocation6], 1
    %1467 = vsyncpa [#allocation9], 1
    %1468 = vsyncpa [#allocation12], 1
    %1469 = vsyncpa [#allocation4], 1

</llo_original>
